<compile_context>
chip_gen: v7x
topology: tpu7x:2x2x1
jax: 0.10.0
libtpu: 0.0.40
codegen_flags: <defaults>
</compile_context>

<pallas_src>
import math
import functools

import jax
import jax.numpy as jnp
from jax.experimental import pallas as pl
from jax.experimental.pallas import tpu as pltpu


def _roll_right(x, s):
    """Right-roll x along its last axis by a static amount s (wraps). Works for any width."""
    w = x.shape[-1]
    s = s % w
    if s == 0:
        return x
    return jnp.concatenate([x[..., w - s:], x[..., :w - s]], axis=-1)


def _rel_attn_kernel(x_ref, wq_ref, wk_ref, wv_ref, g_ref, out_ref, *rest,
                     n_head, save_attention, exp_dtype):
    # refs: x (Bt, L, D) bf16 | wq/wk/wv (D, D) bf16 (scale folded into wq) |
    #       g (d, 2L) bf16 pre-rolled relative table |
    #       out (Bt, L, D) | [attn (Bt, H, L, L)] | scratch q_s/k_s/v_s (Bt*L, D) bf16
    if save_attention:
        a_ref, q_s, k_s, v_s = rest
    else:
        a_ref = None
        q_s, k_s, v_s = rest

    Bt, L, D = x_ref.shape
    H = n_head
    d = D // H
    W2 = 2 * L
    R = Bt * L
    cdt = q_s.dtype

    # --- Q/K/V projections: one wide-N MXU matmul each over all Bt*L rows (f32 accumulate) ---
    x2 = x_ref[...].reshape(R, D)
    q_s[...] = jnp.dot(x2, wq_ref[...], preferred_element_type=jnp.float32).astype(cdt)
    k_s[...] = jnp.dot(x2, wk_ref[...], preferred_element_type=jnp.float32).astype(cdt)
    v_s[...] = jnp.dot(x2, wv_ref[...], preferred_element_type=jnp.float32).astype(cdt)

    g = g_ref[...]                                            # (d, 2L) bf16

    # Skew masks: bit b of the query row index.  Hoisted: computed once per grid step and
    # shared by every head and every batch element in the block.
    row_ids = jax.lax.broadcasted_iota(jnp.int32, (L, W2), 0)
    nbits = (L - 1).bit_length()
    masks = [(row_ids & (1 << b)) != 0 for b in range(nbits)]

    aligned_out = (d % 128 == 0)
    outs = []
    for h in range(H):                                        # static unroll; H is small
        lo, hi = h * d, (h + 1) * d
        q_h2 = q_s[:, lo:hi]                                  # (Bt*L, d) bf16
        k_h = k_s[:, lo:hi].reshape(Bt, L, d)
        v_h = v_s[:, lo:hi].reshape(Bt, L, d)

        # Relative bias on the MXU: m[r, c] = q_h[r] . G[c]; then the row-dependent skew
        #   s_rel[i, j] = m[i, (j - i) mod 2L]
        m = jnp.dot(q_h2, g, preferred_element_type=jnp.float32).reshape(Bt, L, W2)
        y = m
        for b, mask in enumerate(masks):
            y = jnp.where(mask, _roll_right(y, 1 << b), y)
        s_rel = y[..., :L]                                    # (Bt, L, L) f32

        q_h = q_h2.reshape(Bt, L, d)
        scores = jnp.einsum('bqd,bkd->bqk', q_h, k_h,
                            preferred_element_type=jnp.float32)   # (Bt, L, L) f32

        # Softmax (scale already folded into Wq): f32 max/sum, exp in exp_dtype.
        logits = scores + s_rel
        mmax = jnp.max(logits, axis=-1, keepdims=True)
        e = jnp.exp((logits - mmax).astype(exp_dtype)).astype(jnp.float32)
        inv = pl.reciprocal(jnp.sum(e, axis=-1, keepdims=True), approx=True)
        a = e * inv                                               # (Bt, L, L) f32

        if save_attention:
            a_ref[:, h] = a.astype(a_ref.dtype)

        o_h = jnp.einsum('bqk,bkd->bqd', a.astype(cdt), v_h,
                         preferred_element_type=jnp.float32)      # (Bt, L, d) f32

        if aligned_out:
            # lane-tile-aligned store: bounds per-head live ranges at large L
            out_ref[:, :, lo:hi] = o_h.astype(out_ref.dtype)
        else:
            outs.append(o_h)

    if not aligned_out:
        # Single lane-dense store in the final (Bt, L, D) layout.
        out_ref[...] = jnp.concatenate(outs, axis=-1).astype(out_ref.dtype)


def _pick_exp_dtype():
    """bf16 exp on chips with a bf16 EUP (v6e / v7x); f32 on v5e and older (always safe)."""
    try:
        kind = jax.devices()[0].device_kind.lower()
    except Exception:
        return jnp.float32
    if any(tag in kind for tag in ("v2", "v3", "v4", "v5")):
        return jnp.float32
    return jnp.bfloat16


def _pick_block_batch(B, L, target_rows=512):
    """Largest divisor of B with block_batch * L <= target_rows (>= 1)."""
    best = 1
    for bt in range(1, B + 1):
        if B % bt == 0 and bt * L <= target_rows:
            best = bt
    return best


def relative_temporal_self_attention(x, wq, wk, wv, we, n_head, save_attention=True,
                                     *, attn_dtype=jnp.bfloat16, exp_dtype=None,
                                     block_batch=None):
    """Pallas forward pass matching Relative_Temporal_SelfAttention.forward.

    Note: MXU inputs are bf16 with f32 accumulation and the softmax reciprocal is the EUP
    approximation, so results match an f32 reference at ~2e-2.  The returned attention map
    defaults to bfloat16 (pass attn_dtype=jnp.float32 for the PyTorch dtype).
    """
    B, L, D = x.shape
    H = n_head
    assert D % H == 0
    d = D // H
    assert we.shape == (L, d), "e_projection length (len_) must equal the sequence length L"

    scale = 1.0 / math.sqrt(d)
    cdt = jnp.bfloat16
    if exp_dtype is None:
        exp_dtype = _pick_exp_dtype()
    Bt = _pick_block_batch(B, L) if block_batch is None else block_batch
    assert B % Bt == 0
    nb = B // Bt

    # bf16 MXU inputs; fold the softmax scale into the Q projection (scales q.k and s_rel).
    x_c = x.astype(cdt)
    wq_t = (wq.T * scale).astype(cdt)        # (D, D), y = x @ W.T convention
    wk_t = wk.T.astype(cdt)
    wv_t = wv.T.astype(cdt)

    # Pre-rolled relative table G (2L, d):
    #   G[c, :] = We[(L-1) - |((c + L - 1) mod 2L) - (L-1)|, :]  (zero at the unused column)
    # so that (q_h @ G^T)[i, (j - i) mod 2L] == q_h[i] . We[L-1-|i-j|] == s_rel[i, j].
    W2 = 2 * L
    c = jnp.arange(W2)
    p = (c + L - 1) % W2
    rel = (L - 1) - jnp.abs(p - (L - 1))
    g = jnp.where((p == W2 - 1)[:, None], 0.0, we[jnp.clip(rel, 0, L - 1)])   # (2L, d)
    g_t = g.T.astype(cdt)                                                     # (d, 2L)

    kernel = functools.partial(_rel_attn_kernel, n_head=H,
                               save_attention=save_attention, exp_dtype=exp_dtype)

    in_specs = [
        pl.BlockSpec((Bt, L, D), lambda i: (i, 0, 0)),   # x (Bt batches per step)
        pl.BlockSpec((D, D), lambda i: (0, 0)),          # Wq^T (scale folded in)
        pl.BlockSpec((D, D), lambda i: (0, 0)),          # Wk^T
        pl.BlockSpec((D, D), lambda i: (0, 0)),          # Wv^T
        pl.BlockSpec((d, W2), lambda i: (0, 0)),         # relative table G^T
    ]
    out_struct = jax.ShapeDtypeStruct((B, L, D), x.dtype)
    out_spec_o = pl.BlockSpec((Bt, L, D), lambda i: (i, 0, 0))

    scratch_shapes = [pltpu.VMEM((Bt * L, D), cdt) for _ in range(3)]   # q / k / v

    if save_attention:
        out_shape = (out_struct, jax.ShapeDtypeStruct((B, H, L, L), attn_dtype))
        out_specs = (out_spec_o, pl.BlockSpec((Bt, H, L, L), lambda i: (i, 0, 0, 0)))
    else:
        out_shape = out_struct
        out_specs = out_spec_o

    result = pl.pallas_call(
        kernel,
        out_shape=out_shape,
        grid=(nb,),
        in_specs=in_specs,
        out_specs=out_specs,
        scratch_shapes=scratch_shapes,
        compiler_params=pltpu.CompilerParams(
            dimension_semantics=("parallel",),
            vmem_limit_bytes=48 * 1024 * 1024),
    )(x_c, wq_t, wk_t, wv_t, g_t)

    if save_attention:
        return result
    return result, None


def _reference_forward(x, wq, wk, wv, we, n_head):
    """Pure-JAX replica of the PyTorch forward (incl. the pad/reshape skew trick)."""
    B, L, D = x.shape
    H = n_head
    d = D // H
    q = (x @ wq.T).reshape(B, L, H, d)
    k = (x @ wk.T).reshape(B, L, H, d)
    v = (x @ wv.T).reshape(B, L, H, d)
    qe = (q @ we.T).transpose(0, 2, 1, 3)                                   # (B,H,L,L)
    qe = jnp.pad(qe, ((0, 0), (0, 0), (0, 0), (0, L - 1)), mode="reflect")  # (B,H,L,2L-1)
    qe = jnp.pad(qe, ((0, 0), (0, 0), (0, L - 1), (0, 1)))                  # (B,H,2L-1,2L)
    qe = qe.reshape(B, H, 2 * L, 2 * L - 1)
    s_rel = qe[:, :, :L, L - 1:]                                            # (B,H,L,L)
    scale = 1.0 / math.sqrt(d)
    scores = jnp.einsum("blhd,bshd->bhls", q, k)
    A = jax.nn.softmax(scale * (scores + s_rel), axis=-1)
    V = jnp.einsum("bhls,bshd->blhd", A, v)
    return V.reshape(B, L, D), A


if __name__ == "__main__":
    B, L, D, H = 2, 8, 32, 4
    d = D // H

    key = jax.random.PRNGKey(0)
    kq, kk, kv, ke, kx = jax.random.split(key, 5)
    bound_qkv = 1.0 / math.sqrt(D)
    bound_e = 1.0 / math.sqrt(d)
    wq = jax.random.uniform(kq, (D, D), jnp.float32, -bound_qkv, bound_qkv)
    wk = jax.random.uniform(kk, (D, D), jnp.float32, -bound_qkv, bound_qkv)
    wv = jax.random.uniform(kv, (D, D), jnp.float32, -bound_qkv, bound_qkv)
    we = jax.random.uniform(ke, (L, d), jnp.float32, -bound_e, bound_e)
    x = jax.random.normal(kx, (B, L, D), jnp.float32)

    out, attn = relative_temporal_self_attention(x, wq, wk, wv, we, H, save_attention=True)
    out = jax.block_until_ready(out)
    attn = jax.block_until_ready(attn)

    out_na, attn_na = relative_temporal_self_attention(x, wq, wk, wv, we, H, save_attention=False)
    out_na = jax.block_until_ready(out_na)

    out_ref, attn_ref = _reference_forward(x, wq, wk, wv, we, H)
    assert out.shape == (B, L, D) and attn.shape == (B, H, L, L)
    assert attn_na is None
    # bf16 MXU inputs + bf16 attention map + approx reciprocal -> bf16-level tolerance.
    assert jnp.allclose(out, out_ref, atol=2e-2, rtol=2e-2), "output mismatch"
    assert jnp.allclose(attn.astype(jnp.float32), attn_ref, atol=2e-2, rtol=2e-2), "attention mismatch"
    assert jnp.allclose(out_na, out, atol=1e-5, rtol=1e-5), "save_attention=False mismatch"

    print("KERNEL_OK")
</pallas_src>

<mosaic_0001>
module attributes {stable_mosaic.version = 11 : i64} {
  func.func @_rel_attn_kernel(%arg0: i32, %arg1: memref<2x8x32xbf16, #tpu.memory_space<vmem>>, %arg2: memref<32x32xbf16, #tpu.memory_space<vmem>>, %arg3: memref<32x32xbf16, #tpu.memory_space<vmem>>, %arg4: memref<32x32xbf16, #tpu.memory_space<vmem>>, %arg5: memref<8x16xbf16, #tpu.memory_space<vmem>>, %arg6: memref<2x8x32xf32, #tpu.memory_space<vmem>>, %arg7: memref<2x4x8x8xbf16, #tpu.memory_space<vmem>>, %arg8: memref<16x32xbf16, #tpu.memory_space<vmem>>, %arg9: memref<16x32xbf16, #tpu.memory_space<vmem>>, %arg10: memref<16x32xbf16, #tpu.memory_space<vmem>>) attributes {dimension_semantics = [#tpu.dimension_semantics<parallel>], iteration_bounds = array<i64: 1>, scalar_prefetch = 0 : i64, scratch_operands = 3 : i64, tpu.core_type = #tpu.core_type<tc>, window_params = [{transform_indices = @transform_0, window_bounds = array<i64: 2, 8, 32>}, {pipeline_mode = #tpu.pipeline_mode<synchronous>, transform_indices = @transform_1, window_bounds = array<i64: 32, 32>}, {pipeline_mode = #tpu.pipeline_mode<synchronous>, transform_indices = @transform_2, window_bounds = array<i64: 32, 32>}, {pipeline_mode = #tpu.pipeline_mode<synchronous>, transform_indices = @transform_3, window_bounds = array<i64: 32, 32>}, {pipeline_mode = #tpu.pipeline_mode<synchronous>, transform_indices = @transform_4, window_bounds = array<i64: 8, 16>}, {transform_indices = @transform_5, window_bounds = array<i64: 2, 8, 32>}, {transform_indices = @transform_6, window_bounds = array<i64: 2, 4, 8, 8>}]} {
    %c0 = arith.constant 0 : index
    %c0_0 = arith.constant 0 : index
    %c0_1 = arith.constant 0 : index
    %0 = vector.load %arg1[%c0, %c0_0, %c0_1] : memref<2x8x32xbf16, #tpu.memory_space<vmem>>, vector<2x8x32xbf16>
    %1 = vector.shape_cast %0 : vector<2x8x32xbf16> to vector<16x32xbf16>
    %c0_2 = arith.constant 0 : index
    %c0_3 = arith.constant 0 : index
    %2 = vector.load %arg2[%c0_2, %c0_3] : memref<32x32xbf16, #tpu.memory_space<vmem>>, vector<32x32xbf16>
    %cst = arith.constant dense<0.000000e+00> : vector<16x32xf32>
    %3 = tpu.matmul %1, %2, %cst {dimension_numbers = #tpu.dot_dimension_numbers<[1], [0], [0], [1], [0, 0, 1, 1], [], []>} : vector<16x32xbf16>, vector<32x32xbf16>, vector<16x32xf32> -> vector<16x32xf32>
    %4 = arith.truncf %3 : vector<16x32xf32> to vector<16x32xbf16>
    %c0_4 = arith.constant 0 : index
    %c0_5 = arith.constant 0 : index
    %5 = vector.load %arg8[%c0_4, %c0_5] : memref<16x32xbf16, #tpu.memory_space<vmem>>, vector<16x32xbf16>
    tpu.vector_store %arg8[%c0_4, %c0_5], %4 {strides = array<i32>} : memref<16x32xbf16, #tpu.memory_space<vmem>>, vector<16x32xbf16>,
    %c0_6 = arith.constant 0 : index
    %c0_7 = arith.constant 0 : index
    %6 = vector.load %arg3[%c0_6, %c0_7] : memref<32x32xbf16, #tpu.memory_space<vmem>>, vector<32x32xbf16>
    %cst_8 = arith.constant dense<0.000000e+00> : vector<16x32xf32>
    %7 = tpu.matmul %1, %6, %cst_8 {dimension_numbers = #tpu.dot_dimension_numbers<[1], [0], [0], [1], [0, 0, 1, 1], [], []>} : vector<16x32xbf16>, vector<32x32xbf16>, vector<16x32xf32> -> vector<16x32xf32>
    %8 = arith.truncf %7 : vector<16x32xf32> to vector<16x32xbf16>
    %c0_9 = arith.constant 0 : index
    %c0_10 = arith.constant 0 : index
    %9 = vector.load %arg9[%c0_9, %c0_10] : memref<16x32xbf16, #tpu.memory_space<vmem>>, vector<16x32xbf16>
    tpu.vector_store %arg9[%c0_9, %c0_10], %8 {strides = array<i32>} : memref<16x32xbf16, #tpu.memory_space<vmem>>, vector<16x32xbf16>,
    %c0_11 = arith.constant 0 : index
    %c0_12 = arith.constant 0 : index
    %10 = vector.load %arg4[%c0_11, %c0_12] : memref<32x32xbf16, #tpu.memory_space<vmem>>, vector<32x32xbf16>
    %cst_13 = arith.constant dense<0.000000e+00> : vector<16x32xf32>
    %11 = tpu.matmul %1, %10, %cst_13 {dimension_numbers = #tpu.dot_dimension_numbers<[1], [0], [0], [1], [0, 0, 1, 1], [], []>} : vector<16x32xbf16>, vector<32x32xbf16>, vector<16x32xf32> -> vector<16x32xf32>
    %12 = arith.truncf %11 : vector<16x32xf32> to vector<16x32xbf16>
    %c0_14 = arith.constant 0 : index
    %c0_15 = arith.constant 0 : index
    %13 = vector.load %arg10[%c0_14, %c0_15] : memref<16x32xbf16, #tpu.memory_space<vmem>>, vector<16x32xbf16>
    tpu.vector_store %arg10[%c0_14, %c0_15], %12 {strides = array<i32>} : memref<16x32xbf16, #tpu.memory_space<vmem>>, vector<16x32xbf16>,
    %c0_16 = arith.constant 0 : index
    %c0_17 = arith.constant 0 : index
    %14 = vector.load %arg5[%c0_16, %c0_17] : memref<8x16xbf16, #tpu.memory_space<vmem>>, vector<8x16xbf16>
    %15 = tpu.iota {dimensions = array<i32: 0>} : vector<8x16xi32>
    %c1_i32 = arith.constant 1 : i32
    %16 = vector.broadcast %c1_i32 : i32 to vector<8x16xi32>
    %17 = arith.andi %15, %16 : vector<8x16xi32>
    %c0_i32 = arith.constant 0 : i32
    %18 = vector.broadcast %c0_i32 : i32 to vector<8x16xi32>
    %19 = arith.cmpi ne, %17, %18 : vector<8x16xi32>
    %c2_i32 = arith.constant 2 : i32
    %20 = vector.broadcast %c2_i32 : i32 to vector<8x16xi32>
    %21 = arith.andi %15, %20 : vector<8x16xi32>
    %c0_i32_18 = arith.constant 0 : i32
    %22 = vector.broadcast %c0_i32_18 : i32 to vector<8x16xi32>
    %23 = arith.cmpi ne, %21, %22 : vector<8x16xi32>
    %c4_i32 = arith.constant 4 : i32
    %24 = vector.broadcast %c4_i32 : i32 to vector<8x16xi32>
    %25 = arith.andi %15, %24 : vector<8x16xi32>
    %c0_i32_19 = arith.constant 0 : i32
    %26 = vector.broadcast %c0_i32_19 : i32 to vector<8x16xi32>
    %27 = arith.cmpi ne, %25, %26 : vector<8x16xi32>
    %c0_20 = arith.constant 0 : index
    %c0_21 = arith.constant 0 : index
    %28 = vector.load %arg8[%c0_20, %c0_21] : memref<16x32xbf16, #tpu.memory_space<vmem>>, vector<16x8xbf16>
    %c0_22 = arith.constant 0 : index
    %c0_23 = arith.constant 0 : index
    %29 = vector.load %arg9[%c0_22, %c0_23] : memref<16x32xbf16, #tpu.memory_space<vmem>>, vector<16x8xbf16>
    %30 = vector.shape_cast %29 : vector<16x8xbf16> to vector<2x8x8xbf16>
    %c0_24 = arith.constant 0 : index
    %c0_25 = arith.constant 0 : index
    %31 = vector.load %arg10[%c0_24, %c0_25] : memref<16x32xbf16, #tpu.memory_space<vmem>>, vector<16x8xbf16>
    %32 = vector.shape_cast %31 : vector<16x8xbf16> to vector<2x8x8xbf16>
    %cst_26 = arith.constant dense<0.000000e+00> : vector<16x16xf32>
    %33 = tpu.matmul %28, %14, %cst_26 {dimension_numbers = #tpu.dot_dimension_numbers<[1], [0], [0], [1], [0, 0, 1, 1], [], []>} : vector<16x8xbf16>, vector<8x16xbf16>, vector<16x16xf32> -> vector<16x16xf32>
    %34 = vector.shape_cast %33 : vector<16x16xf32> to vector<2x8x16xf32>
    %35 = vector.extract_strided_slice %34 {offsets = [0, 0, 15], sizes = [2, 8, 1], strides = [1, 1, 1]} : vector<2x8x16xf32> to vector<2x8x1xf32>
    %36 = vector.extract_strided_slice %34 {offsets = [0, 0, 0], sizes = [2, 8, 15], strides = [1, 1, 1]} : vector<2x8x16xf32> to vector<2x8x15xf32>
    %37 = tpu.concatenate %35, %36 in 2 : vector<2x8x1xf32>, vector<2x8x15xf32> -> vector<2x8x16xf32>
    %38 = vector.shape_cast %19 : vector<8x16xi1> to vector<1x8x16xi1>
    %39 = vector.broadcast %38 : vector<1x8x16xi1> to vector<2x8x16xi1>
    %40 = arith.select %39, %37, %34 : vector<2x8x16xi1>, vector<2x8x16xf32>
    %41 = vector.extract_strided_slice %40 {offsets = [0, 0, 14], sizes = [2, 8, 2], strides = [1, 1, 1]} : vector<2x8x16xf32> to vector<2x8x2xf32>
    %42 = vector.extract_strided_slice %40 {offsets = [0, 0, 0], sizes = [2, 8, 14], strides = [1, 1, 1]} : vector<2x8x16xf32> to vector<2x8x14xf32>
    %43 = tpu.concatenate %41, %42 in 2 : vector<2x8x2xf32>, vector<2x8x14xf32> -> vector<2x8x16xf32>
    %44 = vector.shape_cast %23 : vector<8x16xi1> to vector<1x8x16xi1>
    %45 = vector.broadcast %44 : vector<1x8x16xi1> to vector<2x8x16xi1>
    %46 = arith.select %45, %43, %40 : vector<2x8x16xi1>, vector<2x8x16xf32>
    %47 = vector.extract_strided_slice %46 {offsets = [0, 0, 12], sizes = [2, 8, 4], strides = [1, 1, 1]} : vector<2x8x16xf32> to vector<2x8x4xf32>
    %48 = vector.extract_strided_slice %46 {offsets = [0, 0, 0], sizes = [2, 8, 12], strides = [1, 1, 1]} : vector<2x8x16xf32> to vector<2x8x12xf32>
    %49 = tpu.concatenate %47, %48 in 2 : vector<2x8x4xf32>, vector<2x8x12xf32> -> vector<2x8x16xf32>
    %50 = vector.shape_cast %27 : vector<8x16xi1> to vector<1x8x16xi1>
    %51 = vector.broadcast %50 : vector<1x8x16xi1> to vector<2x8x16xi1>
    %52 = arith.select %51, %49, %46 : vector<2x8x16xi1>, vector<2x8x16xf32>
    %53 = vector.extract_strided_slice %52 {offsets = [0, 0, 0], sizes = [2, 8, 8], strides = [1, 1, 1]} : vector<2x8x16xf32> to vector<2x8x8xf32>
    %54 = vector.shape_cast %28 : vector<16x8xbf16> to vector<2x8x8xbf16>
    "tpu.trace_start"() <{level = 10 : i32, message = "bqd,bkd->bqk"}> : () -> ()
    %cst_27 = arith.constant dense<0.000000e+00> : vector<2x8x8xf32>
    %55 = tpu.matmul %54, %30, %cst_27 {dimension_numbers = #tpu.dot_dimension_numbers<[2], [2], [1], [1], [0, 0, 0, 1, 1, 1], [0], [0]>} : vector<2x8x8xbf16>, vector<2x8x8xbf16>, vector<2x8x8xf32> -> vector<2x8x8xf32>
    "tpu.trace_stop"() : () -> ()
    %56 = arith.addf %55, %53 : vector<2x8x8xf32>
    %cst_28 = arith.constant dense<0xFF800000> : vector<2x8xf32>
    %57 = vector.multi_reduction <maximumf>, %56, %cst_28 [2] : vector<2x8x8xf32> to vector<2x8xf32>
    %58 = vector.shape_cast %57 : vector<2x8xf32> to vector<2x8x1xf32>
    %59 = vector.broadcast %58 : vector<2x8x1xf32> to vector<2x8x8xf32>
    %60 = arith.subf %56, %59 : vector<2x8x8xf32>
    %61 = arith.truncf %60 : vector<2x8x8xf32> to vector<2x8x8xbf16>
    %62 = math.exp %61 : vector<2x8x8xbf16>
    %63 = arith.extf %62 : vector<2x8x8xbf16> to vector<2x8x8xf32>
    %cst_29 = arith.constant dense<0.000000e+00> : vector<2x8xf32>
    %64 = vector.multi_reduction <add>, %63, %cst_29 [2] : vector<2x8x8xf32> to vector<2x8xf32>
    %65 = vector.shape_cast %64 : vector<2x8xf32> to vector<2x8x1xf32>
    %66 = tpu.reciprocal %65 {approx = true} : vector<2x8x1xf32> -> vector<2x8x1xf32>
    %67 = vector.broadcast %66 : vector<2x8x1xf32> to vector<2x8x8xf32>
    %68 = arith.mulf %63, %67 : vector<2x8x8xf32>
    %69 = arith.truncf %68 : vector<2x8x8xf32> to vector<2x8x8xbf16>
    %c0_30 = arith.constant 0 : index
    %c0_31 = arith.constant 0 : index
    %c0_32 = arith.constant 0 : index
    %c0_33 = arith.constant 0 : index
    %70 = vector.load %arg7[%c0_30, %c0_31, %c0_32, %c0_33] : memref<2x4x8x8xbf16, #tpu.memory_space<vmem>>, vector<2x1x8x8xbf16>
    %71 = vector.shape_cast %70 : vector<2x1x8x8xbf16> to vector<2x8x8xbf16>
    %72 = vector.shape_cast %69 : vector<2x8x8xbf16> to vector<2x1x8x8xbf16>
    tpu.vector_store %arg7[%c0_30, %c0_31, %c0_32, %c0_33], %72 {strides = array<i32>} : memref<2x4x8x8xbf16, #tpu.memory_space<vmem>>, vector<2x1x8x8xbf16>,
    %73 = arith.truncf %68 : vector<2x8x8xf32> to vector<2x8x8xbf16>
    "tpu.trace_start"() <{level = 10 : i32, message = "bqk,bkd->bqd"}> : () -> ()
    %cst_34 = arith.constant dense<0.000000e+00> : vector<2x8x8xf32>
    %74 = tpu.matmul %73, %32, %cst_34 {dimension_numbers = #tpu.dot_dimension_numbers<[2], [1], [1], [2], [0, 0, 0, 1, 1, 2], [0], [0]>} : vector<2x8x8xbf16>, vector<2x8x8xbf16>, vector<2x8x8xf32> -> vector<2x8x8xf32>
    "tpu.trace_stop"() : () -> ()
    %c0_35 = arith.constant 0 : index
    %c8 = arith.constant 8 : index
    %75 = vector.load %arg8[%c0_35, %c8] : memref<16x32xbf16, #tpu.memory_space<vmem>>, vector<16x8xbf16>
    %c0_36 = arith.constant 0 : index
    %c8_37 = arith.constant 8 : index
    %76 = vector.load %arg9[%c0_36, %c8_37] : memref<16x32xbf16, #tpu.memory_space<vmem>>, vector<16x8xbf16>
    %77 = vector.shape_cast %76 : vector<16x8xbf16> to vector<2x8x8xbf16>
    %c0_38 = arith.constant 0 : index
    %c8_39 = arith.constant 8 : index
    %78 = vector.load %arg10[%c0_38, %c8_39] : memref<16x32xbf16, #tpu.memory_space<vmem>>, vector<16x8xbf16>
    %79 = vector.shape_cast %78 : vector<16x8xbf16> to vector<2x8x8xbf16>
    %cst_40 = arith.constant dense<0.000000e+00> : vector<16x16xf32>
    %80 = tpu.matmul %75, %14, %cst_40 {dimension_numbers = #tpu.dot_dimension_numbers<[1], [0], [0], [1], [0, 0, 1, 1], [], []>} : vector<16x8xbf16>, vector<8x16xbf16>, vector<16x16xf32> -> vector<16x16xf32>
    %81 = vector.shape_cast %80 : vector<16x16xf32> to vector<2x8x16xf32>
    %82 = vector.extract_strided_slice %81 {offsets = [0, 0, 15], sizes = [2, 8, 1], strides = [1, 1, 1]} : vector<2x8x16xf32> to vector<2x8x1xf32>
    %83 = vector.extract_strided_slice %81 {offsets = [0, 0, 0], sizes = [2, 8, 15], strides = [1, 1, 1]} : vector<2x8x16xf32> to vector<2x8x15xf32>
    %84 = tpu.concatenate %82, %83 in 2 : vector<2x8x1xf32>, vector<2x8x15xf32> -> vector<2x8x16xf32>
    %85 = vector.shape_cast %19 : vector<8x16xi1> to vector<1x8x16xi1>
    %86 = vector.broadcast %85 : vector<1x8x16xi1> to vector<2x8x16xi1>
    %87 = arith.select %86, %84, %81 : vector<2x8x16xi1>, vector<2x8x16xf32>
    %88 = vector.extract_strided_slice %87 {offsets = [0, 0, 14], sizes = [2, 8, 2], strides = [1, 1, 1]} : vector<2x8x16xf32> to vector<2x8x2xf32>
    %89 = vector.extract_strided_slice %87 {offsets = [0, 0, 0], sizes = [2, 8, 14], strides = [1, 1, 1]} : vector<2x8x16xf32> to vector<2x8x14xf32>
    %90 = tpu.concatenate %88, %89 in 2 : vector<2x8x2xf32>, vector<2x8x14xf32> -> vector<2x8x16xf32>
    %91 = vector.shape_cast %23 : vector<8x16xi1> to vector<1x8x16xi1>
    %92 = vector.broadcast %91 : vector<1x8x16xi1> to vector<2x8x16xi1>
    %93 = arith.select %92, %90, %87 : vector<2x8x16xi1>, vector<2x8x16xf32>
    %94 = vector.extract_strided_slice %93 {offsets = [0, 0, 12], sizes = [2, 8, 4], strides = [1, 1, 1]} : vector<2x8x16xf32> to vector<2x8x4xf32>
    %95 = vector.extract_strided_slice %93 {offsets = [0, 0, 0], sizes = [2, 8, 12], strides = [1, 1, 1]} : vector<2x8x16xf32> to vector<2x8x12xf32>
    %96 = tpu.concatenate %94, %95 in 2 : vector<2x8x4xf32>, vector<2x8x12xf32> -> vector<2x8x16xf32>
    %97 = vector.shape_cast %27 : vector<8x16xi1> to vector<1x8x16xi1>
    %98 = vector.broadcast %97 : vector<1x8x16xi1> to vector<2x8x16xi1>
    %99 = arith.select %98, %96, %93 : vector<2x8x16xi1>, vector<2x8x16xf32>
    %100 = vector.extract_strided_slice %99 {offsets = [0, 0, 0], sizes = [2, 8, 8], strides = [1, 1, 1]} : vector<2x8x16xf32> to vector<2x8x8xf32>
    %101 = vector.shape_cast %75 : vector<16x8xbf16> to vector<2x8x8xbf16>
    "tpu.trace_start"() <{level = 10 : i32, message = "bqd,bkd->bqk"}> : () -> ()
    %cst_41 = arith.constant dense<0.000000e+00> : vector<2x8x8xf32>
    %102 = tpu.matmul %101, %77, %cst_41 {dimension_numbers = #tpu.dot_dimension_numbers<[2], [2], [1], [1], [0, 0, 0, 1, 1, 1], [0], [0]>} : vector<2x8x8xbf16>, vector<2x8x8xbf16>, vector<2x8x8xf32> -> vector<2x8x8xf32>
    "tpu.trace_stop"() : () -> ()
    %103 = arith.addf %102, %100 : vector<2x8x8xf32>
    %cst_42 = arith.constant dense<0xFF800000> : vector<2x8xf32>
    %104 = vector.multi_reduction <maximumf>, %103, %cst_42 [2] : vector<2x8x8xf32> to vector<2x8xf32>
    %105 = vector.shape_cast %104 : vector<2x8xf32> to vector<2x8x1xf32>
    %106 = vector.broadcast %105 : vector<2x8x1xf32> to vector<2x8x8xf32>
    %107 = arith.subf %103, %106 : vector<2x8x8xf32>
    %108 = arith.truncf %107 : vector<2x8x8xf32> to vector<2x8x8xbf16>
    %109 = math.exp %108 : vector<2x8x8xbf16>
    %110 = arith.extf %109 : vector<2x8x8xbf16> to vector<2x8x8xf32>
    %cst_43 = arith.constant dense<0.000000e+00> : vector<2x8xf32>
    %111 = vector.multi_reduction <add>, %110, %cst_43 [2] : vector<2x8x8xf32> to vector<2x8xf32>
    %112 = vector.shape_cast %111 : vector<2x8xf32> to vector<2x8x1xf32>
    %113 = tpu.reciprocal %112 {approx = true} : vector<2x8x1xf32> -> vector<2x8x1xf32>
    %114 = vector.broadcast %113 : vector<2x8x1xf32> to vector<2x8x8xf32>
    %115 = arith.mulf %110, %114 : vector<2x8x8xf32>
    %116 = arith.truncf %115 : vector<2x8x8xf32> to vector<2x8x8xbf16>
    %c0_44 = arith.constant 0 : index
    %c1 = arith.constant 1 : index
    %c0_45 = arith.constant 0 : index
    %c0_46 = arith.constant 0 : index
    %117 = vector.load %arg7[%c0_44, %c1, %c0_45, %c0_46] : memref<2x4x8x8xbf16, #tpu.memory_space<vmem>>, vector<2x1x8x8xbf16>
    %118 = vector.shape_cast %117 : vector<2x1x8x8xbf16> to vector<2x8x8xbf16>
    %119 = vector.shape_cast %116 : vector<2x8x8xbf16> to vector<2x1x8x8xbf16>
    tpu.vector_store %arg7[%c0_44, %c1, %c0_45, %c0_46], %119 {strides = array<i32>} : memref<2x4x8x8xbf16, #tpu.memory_space<vmem>>, vector<2x1x8x8xbf16>,
    %120 = arith.truncf %115 : vector<2x8x8xf32> to vector<2x8x8xbf16>
    "tpu.trace_start"() <{level = 10 : i32, message = "bqk,bkd->bqd"}> : () -> ()
    %cst_47 = arith.constant dense<0.000000e+00> : vector<2x8x8xf32>
    %121 = tpu.matmul %120, %79, %cst_47 {dimension_numbers = #tpu.dot_dimension_numbers<[2], [1], [1], [2], [0, 0, 0, 1, 1, 2], [0], [0]>} : vector<2x8x8xbf16>, vector<2x8x8xbf16>, vector<2x8x8xf32> -> vector<2x8x8xf32>
    "tpu.trace_stop"() : () -> ()
    %c0_48 = arith.constant 0 : index
    %c16 = arith.constant 16 : index
    %122 = vector.load %arg8[%c0_48, %c16] : memref<16x32xbf16, #tpu.memory_space<vmem>>, vector<16x8xbf16>
    %c0_49 = arith.constant 0 : index
    %c16_50 = arith.constant 16 : index
    %123 = vector.load %arg9[%c0_49, %c16_50] : memref<16x32xbf16, #tpu.memory_space<vmem>>, vector<16x8xbf16>
    %124 = vector.shape_cast %123 : vector<16x8xbf16> to vector<2x8x8xbf16>
    %c0_51 = arith.constant 0 : index
    %c16_52 = arith.constant 16 : index
    %125 = vector.load %arg10[%c0_51, %c16_52] : memref<16x32xbf16, #tpu.memory_space<vmem>>, vector<16x8xbf16>
    %126 = vector.shape_cast %125 : vector<16x8xbf16> to vector<2x8x8xbf16>
    %cst_53 = arith.constant dense<0.000000e+00> : vector<16x16xf32>
    %127 = tpu.matmul %122, %14, %cst_53 {dimension_numbers = #tpu.dot_dimension_numbers<[1], [0], [0], [1], [0, 0, 1, 1], [], []>} : vector<16x8xbf16>, vector<8x16xbf16>, vector<16x16xf32> -> vector<16x16xf32>
    %128 = vector.shape_cast %127 : vector<16x16xf32> to vector<2x8x16xf32>
    %129 = vector.extract_strided_slice %128 {offsets = [0, 0, 15], sizes = [2, 8, 1], strides = [1, 1, 1]} : vector<2x8x16xf32> to vector<2x8x1xf32>
    %130 = vector.extract_strided_slice %128 {offsets = [0, 0, 0], sizes = [2, 8, 15], strides = [1, 1, 1]} : vector<2x8x16xf32> to vector<2x8x15xf32>
    %131 = tpu.concatenate %129, %130 in 2 : vector<2x8x1xf32>, vector<2x8x15xf32> -> vector<2x8x16xf32>
    %132 = vector.shape_cast %19 : vector<8x16xi1> to vector<1x8x16xi1>
    %133 = vector.broadcast %132 : vector<1x8x16xi1> to vector<2x8x16xi1>
    %134 = arith.select %133, %131, %128 : vector<2x8x16xi1>, vector<2x8x16xf32>
    %135 = vector.extract_strided_slice %134 {offsets = [0, 0, 14], sizes = [2, 8, 2], strides = [1, 1, 1]} : vector<2x8x16xf32> to vector<2x8x2xf32>
    %136 = vector.extract_strided_slice %134 {offsets = [0, 0, 0], sizes = [2, 8, 14], strides = [1, 1, 1]} : vector<2x8x16xf32> to vector<2x8x14xf32>
    %137 = tpu.concatenate %135, %136 in 2 : vector<2x8x2xf32>, vector<2x8x14xf32> -> vector<2x8x16xf32>
    %138 = vector.shape_cast %23 : vector<8x16xi1> to vector<1x8x16xi1>
    %139 = vector.broadcast %138 : vector<1x8x16xi1> to vector<2x8x16xi1>
    %140 = arith.select %139, %137, %134 : vector<2x8x16xi1>, vector<2x8x16xf32>
    %141 = vector.extract_strided_slice %140 {offsets = [0, 0, 12], sizes = [2, 8, 4], strides = [1, 1, 1]} : vector<2x8x16xf32> to vector<2x8x4xf32>
    %142 = vector.extract_strided_slice %140 {offsets = [0, 0, 0], sizes = [2, 8, 12], strides = [1, 1, 1]} : vector<2x8x16xf32> to vector<2x8x12xf32>
    %143 = tpu.concatenate %141, %142 in 2 : vector<2x8x4xf32>, vector<2x8x12xf32> -> vector<2x8x16xf32>
    %144 = vector.shape_cast %27 : vector<8x16xi1> to vector<1x8x16xi1>
    %145 = vector.broadcast %144 : vector<1x8x16xi1> to vector<2x8x16xi1>
    %146 = arith.select %145, %143, %140 : vector<2x8x16xi1>, vector<2x8x16xf32>
    %147 = vector.extract_strided_slice %146 {offsets = [0, 0, 0], sizes = [2, 8, 8], strides = [1, 1, 1]} : vector<2x8x16xf32> to vector<2x8x8xf32>
    %148 = vector.shape_cast %122 : vector<16x8xbf16> to vector<2x8x8xbf16>
    "tpu.trace_start"() <{level = 10 : i32, message = "bqd,bkd->bqk"}> : () -> ()
    %cst_54 = arith.constant dense<0.000000e+00> : vector<2x8x8xf32>
    %149 = tpu.matmul %148, %124, %cst_54 {dimension_numbers = #tpu.dot_dimension_numbers<[2], [2], [1], [1], [0, 0, 0, 1, 1, 1], [0], [0]>} : vector<2x8x8xbf16>, vector<2x8x8xbf16>, vector<2x8x8xf32> -> vector<2x8x8xf32>
    "tpu.trace_stop"() : () -> ()
    %150 = arith.addf %149, %147 : vector<2x8x8xf32>
    %cst_55 = arith.constant dense<0xFF800000> : vector<2x8xf32>
    %151 = vector.multi_reduction <maximumf>, %150, %cst_55 [2] : vector<2x8x8xf32> to vector<2x8xf32>
    %152 = vector.shape_cast %151 : vector<2x8xf32> to vector<2x8x1xf32>
    %153 = vector.broadcast %152 : vector<2x8x1xf32> to vector<2x8x8xf32>
    %154 = arith.subf %150, %153 : vector<2x8x8xf32>
    %155 = arith.truncf %154 : vector<2x8x8xf32> to vector<2x8x8xbf16>
    %156 = math.exp %155 : vector<2x8x8xbf16>
    %157 = arith.extf %156 : vector<2x8x8xbf16> to vector<2x8x8xf32>
    %cst_56 = arith.constant dense<0.000000e+00> : vector<2x8xf32>
    %158 = vector.multi_reduction <add>, %157, %cst_56 [2] : vector<2x8x8xf32> to vector<2x8xf32>
    %159 = vector.shape_cast %158 : vector<2x8xf32> to vector<2x8x1xf32>
    %160 = tpu.reciprocal %159 {approx = true} : vector<2x8x1xf32> -> vector<2x8x1xf32>
    %161 = vector.broadcast %160 : vector<2x8x1xf32> to vector<2x8x8xf32>
    %162 = arith.mulf %157, %161 : vector<2x8x8xf32>
    %163 = arith.truncf %162 : vector<2x8x8xf32> to vector<2x8x8xbf16>
    %c0_57 = arith.constant 0 : index
    %c2 = arith.constant 2 : index
    %c0_58 = arith.constant 0 : index
    %c0_59 = arith.constant 0 : index
    %164 = vector.load %arg7[%c0_57, %c2, %c0_58, %c0_59] : memref<2x4x8x8xbf16, #tpu.memory_space<vmem>>, vector<2x1x8x8xbf16>
    %165 = vector.shape_cast %164 : vector<2x1x8x8xbf16> to vector<2x8x8xbf16>
    %166 = vector.shape_cast %163 : vector<2x8x8xbf16> to vector<2x1x8x8xbf16>
    tpu.vector_store %arg7[%c0_57, %c2, %c0_58, %c0_59], %166 {strides = array<i32>} : memref<2x4x8x8xbf16, #tpu.memory_space<vmem>>, vector<2x1x8x8xbf16>,
    %167 = arith.truncf %162 : vector<2x8x8xf32> to vector<2x8x8xbf16>
    "tpu.trace_start"() <{level = 10 : i32, message = "bqk,bkd->bqd"}> : () -> ()
    %cst_60 = arith.constant dense<0.000000e+00> : vector<2x8x8xf32>
    %168 = tpu.matmul %167, %126, %cst_60 {dimension_numbers = #tpu.dot_dimension_numbers<[2], [1], [1], [2], [0, 0, 0, 1, 1, 2], [0], [0]>} : vector<2x8x8xbf16>, vector<2x8x8xbf16>, vector<2x8x8xf32> -> vector<2x8x8xf32>
    "tpu.trace_stop"() : () -> ()
    %c0_61 = arith.constant 0 : index
    %c24 = arith.constant 24 : index
    %169 = vector.load %arg8[%c0_61, %c24] : memref<16x32xbf16, #tpu.memory_space<vmem>>, vector<16x8xbf16>
    %c0_62 = arith.constant 0 : index
    %c24_63 = arith.constant 24 : index
    %170 = vector.load %arg9[%c0_62, %c24_63] : memref<16x32xbf16, #tpu.memory_space<vmem>>, vector<16x8xbf16>
    %171 = vector.shape_cast %170 : vector<16x8xbf16> to vector<2x8x8xbf16>
    %c0_64 = arith.constant 0 : index
    %c24_65 = arith.constant 24 : index
    %172 = vector.load %arg10[%c0_64, %c24_65] : memref<16x32xbf16, #tpu.memory_space<vmem>>, vector<16x8xbf16>
    %173 = vector.shape_cast %172 : vector<16x8xbf16> to vector<2x8x8xbf16>
    %cst_66 = arith.constant dense<0.000000e+00> : vector<16x16xf32>
    %174 = tpu.matmul %169, %14, %cst_66 {dimension_numbers = #tpu.dot_dimension_numbers<[1], [0], [0], [1], [0, 0, 1, 1], [], []>} : vector<16x8xbf16>, vector<8x16xbf16>, vector<16x16xf32> -> vector<16x16xf32>
    %175 = vector.shape_cast %174 : vector<16x16xf32> to vector<2x8x16xf32>
    %176 = vector.extract_strided_slice %175 {offsets = [0, 0, 15], sizes = [2, 8, 1], strides = [1, 1, 1]} : vector<2x8x16xf32> to vector<2x8x1xf32>
    %177 = vector.extract_strided_slice %175 {offsets = [0, 0, 0], sizes = [2, 8, 15], strides = [1, 1, 1]} : vector<2x8x16xf32> to vector<2x8x15xf32>
    %178 = tpu.concatenate %176, %177 in 2 : vector<2x8x1xf32>, vector<2x8x15xf32> -> vector<2x8x16xf32>
    %179 = vector.shape_cast %19 : vector<8x16xi1> to vector<1x8x16xi1>
    %180 = vector.broadcast %179 : vector<1x8x16xi1> to vector<2x8x16xi1>
    %181 = arith.select %180, %178, %175 : vector<2x8x16xi1>, vector<2x8x16xf32>
    %182 = vector.extract_strided_slice %181 {offsets = [0, 0, 14], sizes = [2, 8, 2], strides = [1, 1, 1]} : vector<2x8x16xf32> to vector<2x8x2xf32>
    %183 = vector.extract_strided_slice %181 {offsets = [0, 0, 0], sizes = [2, 8, 14], strides = [1, 1, 1]} : vector<2x8x16xf32> to vector<2x8x14xf32>
    %184 = tpu.concatenate %182, %183 in 2 : vector<2x8x2xf32>, vector<2x8x14xf32> -> vector<2x8x16xf32>
    %185 = vector.shape_cast %23 : vector<8x16xi1> to vector<1x8x16xi1>
    %186 = vector.broadcast %185 : vector<1x8x16xi1> to vector<2x8x16xi1>
    %187 = arith.select %186, %184, %181 : vector<2x8x16xi1>, vector<2x8x16xf32>
    %188 = vector.extract_strided_slice %187 {offsets = [0, 0, 12], sizes = [2, 8, 4], strides = [1, 1, 1]} : vector<2x8x16xf32> to vector<2x8x4xf32>
    %189 = vector.extract_strided_slice %187 {offsets = [0, 0, 0], sizes = [2, 8, 12], strides = [1, 1, 1]} : vector<2x8x16xf32> to vector<2x8x12xf32>
    %190 = tpu.concatenate %188, %189 in 2 : vector<2x8x4xf32>, vector<2x8x12xf32> -> vector<2x8x16xf32>
    %191 = vector.shape_cast %27 : vector<8x16xi1> to vector<1x8x16xi1>
    %192 = vector.broadcast %191 : vector<1x8x16xi1> to vector<2x8x16xi1>
    %193 = arith.select %192, %190, %187 : vector<2x8x16xi1>, vector<2x8x16xf32>
    %194 = vector.extract_strided_slice %193 {offsets = [0, 0, 0], sizes = [2, 8, 8], strides = [1, 1, 1]} : vector<2x8x16xf32> to vector<2x8x8xf32>
    %195 = vector.shape_cast %169 : vector<16x8xbf16> to vector<2x8x8xbf16>
    "tpu.trace_start"() <{level = 10 : i32, message = "bqd,bkd->bqk"}> : () -> ()
    %cst_67 = arith.constant dense<0.000000e+00> : vector<2x8x8xf32>
    %196 = tpu.matmul %195, %171, %cst_67 {dimension_numbers = #tpu.dot_dimension_numbers<[2], [2], [1], [1], [0, 0, 0, 1, 1, 1], [0], [0]>} : vector<2x8x8xbf16>, vector<2x8x8xbf16>, vector<2x8x8xf32> -> vector<2x8x8xf32>
    "tpu.trace_stop"() : () -> ()
    %197 = arith.addf %196, %194 : vector<2x8x8xf32>
    %cst_68 = arith.constant dense<0xFF800000> : vector<2x8xf32>
    %198 = vector.multi_reduction <maximumf>, %197, %cst_68 [2] : vector<2x8x8xf32> to vector<2x8xf32>
    %199 = vector.shape_cast %198 : vector<2x8xf32> to vector<2x8x1xf32>
    %200 = vector.broadcast %199 : vector<2x8x1xf32> to vector<2x8x8xf32>
    %201 = arith.subf %197, %200 : vector<2x8x8xf32>
    %202 = arith.truncf %201 : vector<2x8x8xf32> to vector<2x8x8xbf16>
    %203 = math.exp %202 : vector<2x8x8xbf16>
    %204 = arith.extf %203 : vector<2x8x8xbf16> to vector<2x8x8xf32>
    %cst_69 = arith.constant dense<0.000000e+00> : vector<2x8xf32>
    %205 = vector.multi_reduction <add>, %204, %cst_69 [2] : vector<2x8x8xf32> to vector<2x8xf32>
    %206 = vector.shape_cast %205 : vector<2x8xf32> to vector<2x8x1xf32>
    %207 = tpu.reciprocal %206 {approx = true} : vector<2x8x1xf32> -> vector<2x8x1xf32>
    %208 = vector.broadcast %207 : vector<2x8x1xf32> to vector<2x8x8xf32>
    %209 = arith.mulf %204, %208 : vector<2x8x8xf32>
    %210 = arith.truncf %209 : vector<2x8x8xf32> to vector<2x8x8xbf16>
    %c0_70 = arith.constant 0 : index
    %c3 = arith.constant 3 : index
    %c0_71 = arith.constant 0 : index
    %c0_72 = arith.constant 0 : index
    %211 = vector.load %arg7[%c0_70, %c3, %c0_71, %c0_72] : memref<2x4x8x8xbf16, #tpu.memory_space<vmem>>, vector<2x1x8x8xbf16>
    %212 = vector.shape_cast %211 : vector<2x1x8x8xbf16> to vector<2x8x8xbf16>
    %213 = vector.shape_cast %210 : vector<2x8x8xbf16> to vector<2x1x8x8xbf16>
    tpu.vector_store %arg7[%c0_70, %c3, %c0_71, %c0_72], %213 {strides = array<i32>} : memref<2x4x8x8xbf16, #tpu.memory_space<vmem>>, vector<2x1x8x8xbf16>,
    %214 = arith.truncf %209 : vector<2x8x8xf32> to vector<2x8x8xbf16>
    "tpu.trace_start"() <{level = 10 : i32, message = "bqk,bkd->bqd"}> : () -> ()
    %cst_73 = arith.constant dense<0.000000e+00> : vector<2x8x8xf32>
    %215 = tpu.matmul %214, %173, %cst_73 {dimension_numbers = #tpu.dot_dimension_numbers<[2], [1], [1], [2], [0, 0, 0, 1, 1, 2], [0], [0]>} : vector<2x8x8xbf16>, vector<2x8x8xbf16>, vector<2x8x8xf32> -> vector<2x8x8xf32>
    "tpu.trace_stop"() : () -> ()
    %216 = tpu.concatenate %74, %121, %168, %215 in 2 : vector<2x8x8xf32>, vector<2x8x8xf32>, vector<2x8x8xf32>, vector<2x8x8xf32> -> vector<2x8x32xf32>
    %c0_74 = arith.constant 0 : index
    %c0_75 = arith.constant 0 : index
    %c0_76 = arith.constant 0 : index
    %217 = vector.load %arg6[%c0_74, %c0_75, %c0_76] : memref<2x8x32xf32, #tpu.memory_space<vmem>>, vector<2x8x32xf32>
    tpu.vector_store %arg6[%c0_74, %c0_75, %c0_76], %216 {strides = array<i32>} : memref<2x8x32xf32, #tpu.memory_space<vmem>>, vector<2x8x32xf32>,
    return
  }
  func.func @transform_0(%arg0: i32) -> (i32, i32, i32) {
    %c0_i32 = arith.constant 0 : i32
    %c0_i32_0 = arith.constant 0 : i32
    %c0_i32_1 = arith.constant 0 : i32
    return %arg0, %c0_i32, %c0_i32_0 : i32, i32, i32
  }
  func.func @transform_1(%arg0: i32) -> (i32, i32) {
    %c0_i32 = arith.constant 0 : i32
    %c0_i32_0 = arith.constant 0 : i32
    %c0_i32_1 = arith.constant 0 : i32
    return %c0_i32, %c0_i32_0 : i32, i32
  }
  func.func @transform_2(%arg0: i32) -> (i32, i32) {
    %c0_i32 = arith.constant 0 : i32
    %c0_i32_0 = arith.constant 0 : i32
    %c0_i32_1 = arith.constant 0 : i32
    return %c0_i32, %c0_i32_0 : i32, i32
  }
  func.func @transform_3(%arg0: i32) -> (i32, i32) {
    %c0_i32 = arith.constant 0 : i32
    %c0_i32_0 = arith.constant 0 : i32
    %c0_i32_1 = arith.constant 0 : i32
    return %c0_i32, %c0_i32_0 : i32, i32
  }
  func.func @transform_4(%arg0: i32) -> (i32, i32) {
    %c0_i32 = arith.constant 0 : i32
    %c0_i32_0 = arith.constant 0 : i32
    %c0_i32_1 = arith.constant 0 : i32
    return %c0_i32, %c0_i32_0 : i32, i32
  }
  func.func @transform_5(%arg0: i32) -> (i32, i32, i32) {
    %c0_i32 = arith.constant 0 : i32
    %c0_i32_0 = arith.constant 0 : i32
    %c0_i32_1 = arith.constant 0 : i32
    return %arg0, %c0_i32, %c0_i32_0 : i32, i32, i32
  }
  func.func @transform_6(%arg0: i32) -> (i32, i32, i32, i32) {
    %c0_i32 = arith.constant 0 : i32
    %c0_i32_0 = arith.constant 0 : i32
    %c0_i32_1 = arith.constant 0 : i32
    %c0_i32_2 = arith.constant 0 : i32
    return %arg0, %c0_i32, %c0_i32_0, %c0_i32_1 : i32, i32, i32, i32
  }
}

</mosaic_0001>

<llo_original>
// kernel: tpu_custom_call.1
$region0: #{tpu_custom_call.1}
  #allocation0 [shape = 'u32[]', space=smem, size = 0x4, offset = 0x4, fixed_abs, tag = 'smem constant byte address 0x4 - core index']
  #allocation1 [shape = 'u32[144,128]{1,0:T(1,128)}', space=vmem, size = 0x12000, scoped, tag = 'internal scratch']
  #allocation2 [shape = 'bf16[16,32]{1,0:T(16,128)(2,1)}', space=vmem, size = 0x1000, scoped, tag = 'scratch operand']
  #allocation3 [shape = 'bf16[16,32]{1,0:T(16,128)(2,1)}', space=vmem, size = 0x1000, scoped, tag = 'scratch operand']
  #allocation4 [shape = 'bf16[16,32]{1,0:T(16,128)(2,1)}', space=vmem, size = 0x1000, scoped, tag = 'scratch operand']
  %s0 = inlined_call_operand.hbm [shape: bf16[2,8,32], index: 0, kind: input, shape index: {}]
  %s1 = inlined_call_operand.hbm [shape: bf16[32,32], index: 1, kind: input, shape index: {}]
  %s2 = inlined_call_operand.hbm [shape: bf16[32,32], index: 2, kind: input, shape index: {}]
  %s3 = inlined_call_operand.hbm [shape: bf16[32,32], index: 3, kind: input, shape index: {}]
  %s4 = inlined_call_operand.vmem [shape: bf16[8,16], index: 4, kind: input, shape index: {}]
  %s5 = inlined_call_operand.hbm [shape: f32[2,8,32], index: 5, kind: output, shape index: {0}]
  %s6 = inlined_call_operand.hbm [shape: bf16[2,4,8,8], index: 6, kind: output, shape index: {1}]
  %7 = xla_tuple %s5, %s6
  %s8 = sld [smem:[#allocation0]]
  $region54: #{tpu_custom_call.1} parent=0
    _
  %s10 = ssub.s32 1, %s8
  %s11 = scalar_select 0, %s10, %s8
  $region1: #{tpu_custom_call.1} parent=0
    #allocation5 [shape = 'u8[4096]{0}', space=vmem, size = 0x1000, scoped, tag = 'input window, operand 0, single buffered']
    #allocation6 [shape = 's32[1]{0}', space=sflag, size = 0x4, scoped, tag = 'scoped memory for tpu_custom_call.1']
    #allocation7 [shape = 's32[1]{0}', space=sflag, size = 0x4, scoped, tag = 'scoped memory for tpu_custom_call.1']
    #allocation8 [shape = 'u8[8192]{0}', space=vmem, size = 0x2000, scoped, tag = 'input window, operand 1, single buffered']
    #allocation9 [shape = 's32[1]{0}', space=sflag, size = 0x4, scoped, tag = 'scoped memory for tpu_custom_call.1']
    #allocation10 [shape = 'u8[8192]{0}', space=vmem, size = 0x2000, scoped, tag = 'input window, operand 2, single buffered']
    #allocation11 [shape = 'u8[8192]{0}', space=vmem, size = 0x2000, scoped, tag = 'input window, operand 3, single buffered']
    #allocation12 [shape = 's32[1]{0}', space=sflag, size = 0x4, scoped, tag = 'scoped memory for tpu_custom_call.1']
    #allocation13 [shape = 'u8[8192]{0}', space=vmem, size = 0x2000, scoped, tag = 'output window, operand 0, single buffered']
    #allocation14 [shape = 'u8[16384]{0}', space=vmem, size = 0x4000, scoped, tag = 'output window, operand 1, single buffered']
    #allocation15 [shape = 's32[1]{0}', space=sflag, size = 0x4, scoped, tag = 'scoped memory for tpu_custom_call.1']
    %12 = vsyncpa [#allocation6], 0
    %13 = vsyncpa [#allocation9], 0
    %14 = vsyncpa [#allocation12], 0
    %15 = vsyncpa [#allocation7], 0
    %16 = vsyncpa [#allocation15], 0
    // Predicated region
    $region2: #{tpu_custom_call.1} parent=1 // pred_check
      _
    $region3: #{tpu_custom_call.1} parent=1 // pred_check_branch
      %18 = sbr.rel (0) target = $region5
    $region4: #{tpu_custom_call.1} parent=1 // pred_region
      %s20 = ssub.s32 128, 128
      %21 = vsyncadd [#allocation6], %s20
      %s22 = sshll.u32 [#allocation5], 4
      %s23 = int_to_ptr.vmem [resolvable:$true] %s22
      %28 = dma.hbm_to_vmem [thread:$0]  %s0, 128, %s23, [#allocation6], 64, 64, 4
    $region5: #{tpu_custom_call.1} parent=1 // pred_fallthru
      _
    // Predicated region
    $region6: #{tpu_custom_call.1} parent=1 // pred_check
      _
    $region7: #{tpu_custom_call.1} parent=1 // pred_check_branch
      %30 = sbr.rel (0) target = $region9
    $region8: #{tpu_custom_call.1} parent=1 // pred_region
      %s32 = ssub.s32 256, 256
      %33 = vsyncadd [#allocation9], %s32
      %s34 = sshll.u32 [#allocation8], 4
      %s35 = int_to_ptr.vmem [resolvable:$true] %s34
      %40 = dma.hbm_to_vmem [thread:$0]  %s1, 256, %s35, [#allocation9], 64, 64, 4
    $region9: #{tpu_custom_call.1} parent=1 // pred_fallthru
      _
    // Predicated region
    $region10: #{tpu_custom_call.1} parent=1 // pred_check
      _
    $region11: #{tpu_custom_call.1} parent=1 // pred_check_branch
      %42 = sbr.rel (0) target = $region13
    $region12: #{tpu_custom_call.1} parent=1 // pred_region
      %s44 = ssub.s32 256, 256
      %45 = vsyncadd [#allocation9], %s44
      %s46 = sshll.u32 [#allocation10], 4
      %s47 = int_to_ptr.vmem [resolvable:$true] %s46
      %52 = dma.hbm_to_vmem [thread:$0]  %s2, 256, %s47, [#allocation9], 64, 64, 4
    $region13: #{tpu_custom_call.1} parent=1 // pred_fallthru
      _
    // Predicated region
    $region14: #{tpu_custom_call.1} parent=1 // pred_check
      _
    $region15: #{tpu_custom_call.1} parent=1 // pred_check_branch
      %54 = sbr.rel (0) target = $region17
    $region16: #{tpu_custom_call.1} parent=1 // pred_region
      %s56 = ssub.s32 256, 256
      %57 = vsyncadd [#allocation12], %s56
      %s58 = sshll.u32 [#allocation11], 4
      %s59 = int_to_ptr.vmem [resolvable:$true] %s58
      %64 = dma.hbm_to_vmem [thread:$0]  %s3, 256, %s59, [#allocation12], 64, 64, 4
    $region17: #{tpu_custom_call.1} parent=1 // pred_fallthru
      _
    // Predicated region
    $region18: #{tpu_custom_call.1} parent=1 // pred_check
      _
    $region19: #{tpu_custom_call.1} parent=1 // pred_check_branch
      %66 = sbr.rel (0) target = $region21
    $region20: #{tpu_custom_call.1} parent=1 // pred_region
      _
    $region21: #{tpu_custom_call.1} parent=1 // pred_fallthru
      _
    // Predicated region
    $region22: #{tpu_custom_call.1} parent=1 // pred_check
      _
    $region23: #{tpu_custom_call.1} parent=1 // pred_check_branch
      %68 = sbr.rel (0) target = $region25
    $region24: #{tpu_custom_call.1} parent=1 // pred_region
      %69 = dma.done [#allocation6], 128
    $region25: #{tpu_custom_call.1} parent=1 // pred_fallthru
      _
    // Predicated region
    $region26: #{tpu_custom_call.1} parent=1 // pred_check
      _
    $region27: #{tpu_custom_call.1} parent=1 // pred_check_branch
      %71 = sbr.rel (0) target = $region29
    $region28: #{tpu_custom_call.1} parent=1 // pred_region
      %72 = dma.done [#allocation9], 256
    $region29: #{tpu_custom_call.1} parent=1 // pred_fallthru
      _
    // Predicated region
    $region30: #{tpu_custom_call.1} parent=1 // pred_check
      _
    $region31: #{tpu_custom_call.1} parent=1 // pred_check_branch
      %74 = sbr.rel (0) target = $region33
    $region32: #{tpu_custom_call.1} parent=1 // pred_region
      %75 = dma.done [#allocation9], 256
    $region33: #{tpu_custom_call.1} parent=1 // pred_fallthru
      _
    // Predicated region
    $region34: #{tpu_custom_call.1} parent=1 // pred_check
      _
    $region35: #{tpu_custom_call.1} parent=1 // pred_check_branch
      %77 = sbr.rel (0) target = $region37
    $region36: #{tpu_custom_call.1} parent=1 // pred_region
      %78 = dma.done [#allocation12], 256
    $region37: #{tpu_custom_call.1} parent=1 // pred_fallthru
      _
    %v80 = vld [vmem:[#allocation5] sm:$0xf]
    %v81 = vld [vmem:[#allocation5 + $0x4] sm:$0xf]
    %v82 = vld [vmem:[#allocation8] sm:$0xf]
    %v83 = vld [vmem:[#allocation8 + $0x4] sm:$0xf]
    %v84 = vld [vmem:[#allocation8 + $0x8] sm:$0xf]
    %v85 = vld [vmem:[#allocation8 + $0xc] sm:$0xf]
    %v88 = vunpack.c.l.b16 %v80
    %v89 = vunpack.c.l.b16 %v81
    %v90 = vpack.c.b16 %v89, %v88
    %v95 = vunpack.c.l.b16 %v82
    %v96 = vunpack.c.l.b16 %v83
    %v97 = vunpack.c.l.b16 %v84
    %v98 = vunpack.c.l.b16 %v85
    %v99 = vpack.c.b16 %v96, %v95
    %v100 = vpack.c.b16 %v98, %v97
    %vm103 = vcmask 261120
    %v105 = vsel %vm103, %v90, 0
    %107 = vmatprep.subr.bf16.mxu0 0
    %108 = vmatpush1.bf16.msra.mxu0 %v99
    %109 = vmatprep.subr.bf16.mxu0 0
    %110 = vmatpush1.bf16.msra.mxu0 %v100
    %111 = vmatprep.subr.bf16.mxu0 0
    %112 = vmatpush1.bf16.msra.mxu0 0
    %113 = vmatprep.subr.bf16.mxu0 0
    %114 = vmatpush1.bf16.msra.mxu0 0
    %115 = vmatprep.subr.bf16.mxu0 0
    %116 = vmatpush1.bf16.msra.mxu0 0
    %117 = vmatprep.subr.bf16.mxu0 0
    %118 = vmatpush1.bf16.msra.mxu0 0
    %119 = vmatprep.subr.bf16.mxu0 0
    %120 = vmatpush1.bf16.msra.mxu0 0
    %121 = vmatprep.subr.bf16.mxu0 0
    %122 = vmatpush1.bf16.msra.mxu0 0
    %123 = vmatprep.subr.bf16.mxu0 0
    %124 = vmatpush1.bf16.msra.mxu0 0
    %125 = vmatprep.subr.bf16.mxu0 0
    %126 = vmatpush1.bf16.msra.mxu0 0
    %127 = vmatprep.subr.bf16.mxu0 0
    %128 = vmatpush1.bf16.msra.mxu0 0
    %129 = vmatprep.subr.bf16.mxu0 0
    %130 = vmatpush1.bf16.msra.mxu0 0
    %131 = vmatprep.subr.bf16.mxu0 0
    %132 = vmatpush1.bf16.msra.mxu0 0
    %133 = vmatprep.subr.bf16.mxu0 0
    %134 = vmatpush1.bf16.msra.mxu0 0
    %135 = vmatprep.subr.bf16.mxu0 0
    %136 = vmatpush1.bf16.msra.mxu0 0
    %137 = vmatprep.subr.bf16.mxu0 0
    %138 = vmatpush1.bf16.msra.mxu0 0
    %139 = vmatprep.mubr.bf16.mxu0 0
    %140 = vmatmul.mubr.bf16.gmra.mrb[0].mxu0 %v105
    %v141 = vpop.f32.mrb[0].mxu0
    %v142 = vadd.f32 0.0, %v141
    %v143 = vpop.f32.mrb[0].mxu0
    %v144 = vpop.f32.mrb[0].mxu0
    %v145 = vadd.f32 0.0, %v144
    %v146 = vpop.f32.mrb[0].mxu0
    %147 = vdwg.mxu0
    %v148 = vpack.c.bf16 %v145, %v142
    %149 = vst.msk [vmem:[#allocation2] sm:$0xff] %vm103, %v148
    %v150 = vld [vmem:[#allocation10] sm:$0xf]
    %v151 = vld [vmem:[#allocation10 + $0x4] sm:$0xf]
    %v152 = vld [vmem:[#allocation10 + $0x8] sm:$0xf]
    %v153 = vld [vmem:[#allocation10 + $0xc] sm:$0xf]
    %v158 = vunpack.c.l.b16 %v150
    %v159 = vunpack.c.l.b16 %v151
    %v160 = vunpack.c.l.b16 %v152
    %v161 = vunpack.c.l.b16 %v153
    %v162 = vpack.c.b16 %v159, %v158
    %v163 = vpack.c.b16 %v161, %v160
    %166 = vmatprep.subr.bf16.mxu0 0
    %167 = vmatpush1.bf16.msra.mxu0 %v162
    %168 = vmatprep.subr.bf16.mxu0 0
    %169 = vmatpush1.bf16.msra.mxu0 %v163
    %170 = vmatprep.subr.bf16.mxu0 0
    %171 = vmatpush1.bf16.msra.mxu0 0
    %172 = vmatprep.subr.bf16.mxu0 0
    %173 = vmatpush1.bf16.msra.mxu0 0
    %174 = vmatprep.subr.bf16.mxu0 0
    %175 = vmatpush1.bf16.msra.mxu0 0
    %176 = vmatprep.subr.bf16.mxu0 0
    %177 = vmatpush1.bf16.msra.mxu0 0
    %178 = vmatprep.subr.bf16.mxu0 0
    %179 = vmatpush1.bf16.msra.mxu0 0
    %180 = vmatprep.subr.bf16.mxu0 0
    %181 = vmatpush1.bf16.msra.mxu0 0
    %182 = vmatprep.subr.bf16.mxu0 0
    %183 = vmatpush1.bf16.msra.mxu0 0
    %184 = vmatprep.subr.bf16.mxu0 0
    %185 = vmatpush1.bf16.msra.mxu0 0
    %186 = vmatprep.subr.bf16.mxu0 0
    %187 = vmatpush1.bf16.msra.mxu0 0
    %188 = vmatprep.subr.bf16.mxu0 0
    %189 = vmatpush1.bf16.msra.mxu0 0
    %190 = vmatprep.subr.bf16.mxu0 0
    %191 = vmatpush1.bf16.msra.mxu0 0
    %192 = vmatprep.subr.bf16.mxu0 0
    %193 = vmatpush1.bf16.msra.mxu0 0
    %194 = vmatprep.subr.bf16.mxu0 0
    %195 = vmatpush1.bf16.msra.mxu0 0
    %196 = vmatprep.subr.bf16.mxu0 0
    %197 = vmatpush1.bf16.msra.mxu0 0
    %198 = vmatprep.mubr.bf16.mxu0 0
    %199 = vmatmul.mubr.bf16.gmra.mrb[0].mxu0 %v105
    %v200 = vpop.f32.mrb[0].mxu0
    %v201 = vadd.f32 0.0, %v200
    %v202 = vpop.f32.mrb[0].mxu0
    %v203 = vpop.f32.mrb[0].mxu0
    %v204 = vadd.f32 0.0, %v203
    %v205 = vpop.f32.mrb[0].mxu0
    %206 = vdwg.mxu0
    %v207 = vpack.c.bf16 %v204, %v201
    %208 = vst.msk [vmem:[#allocation3] sm:$0xff] %vm103, %v207
    %v209 = vld [vmem:[#allocation11] sm:$0xf]
    %v210 = vld [vmem:[#allocation11 + $0x4] sm:$0xf]
    %v211 = vld [vmem:[#allocation11 + $0x8] sm:$0xf]
    %v212 = vld [vmem:[#allocation11 + $0xc] sm:$0xf]
    %v217 = vunpack.c.l.b16 %v209
    %v218 = vunpack.c.l.b16 %v210
    %v219 = vunpack.c.l.b16 %v211
    %v220 = vunpack.c.l.b16 %v212
    %v221 = vpack.c.b16 %v218, %v217
    %v222 = vpack.c.b16 %v220, %v219
    %225 = vmatprep.subr.bf16.mxu0 0
    %226 = vmatpush1.bf16.msra.mxu0 %v221
    %227 = vmatprep.subr.bf16.mxu0 0
    %228 = vmatpush1.bf16.msra.mxu0 %v222
    %229 = vmatprep.subr.bf16.mxu0 0
    %230 = vmatpush1.bf16.msra.mxu0 0
    %231 = vmatprep.subr.bf16.mxu0 0
    %232 = vmatpush1.bf16.msra.mxu0 0
    %233 = vmatprep.subr.bf16.mxu0 0
    %234 = vmatpush1.bf16.msra.mxu0 0
    %235 = vmatprep.subr.bf16.mxu0 0
    %236 = vmatpush1.bf16.msra.mxu0 0
    %237 = vmatprep.subr.bf16.mxu0 0
    %238 = vmatpush1.bf16.msra.mxu0 0
    %239 = vmatprep.subr.bf16.mxu0 0
    %240 = vmatpush1.bf16.msra.mxu0 0
    %241 = vmatprep.subr.bf16.mxu0 0
    %242 = vmatpush1.bf16.msra.mxu0 0
    %243 = vmatprep.subr.bf16.mxu0 0
    %244 = vmatpush1.bf16.msra.mxu0 0
    %245 = vmatprep.subr.bf16.mxu0 0
    %246 = vmatpush1.bf16.msra.mxu0 0
    %247 = vmatprep.subr.bf16.mxu0 0
    %248 = vmatpush1.bf16.msra.mxu0 0
    %249 = vmatprep.subr.bf16.mxu0 0
    %250 = vmatpush1.bf16.msra.mxu0 0
    %251 = vmatprep.subr.bf16.mxu0 0
    %252 = vmatpush1.bf16.msra.mxu0 0
    %253 = vmatprep.subr.bf16.mxu0 0
    %254 = vmatpush1.bf16.msra.mxu0 0
    %255 = vmatprep.subr.bf16.mxu0 0
    %256 = vmatpush1.bf16.msra.mxu0 0
    %257 = vmatprep.mubr.bf16.mxu0 0
    %258 = vmatmul.mubr.bf16.gmra.mrb[0].mxu0 %v105
    %v259 = vpop.f32.mrb[0].mxu0
    %v260 = vadd.f32 0.0, %v259
    %v261 = vpop.f32.mrb[0].mxu0
    %v262 = vpop.f32.mrb[0].mxu0
    %v263 = vadd.f32 0.0, %v262
    %v264 = vpop.f32.mrb[0].mxu0
    %265 = vdwg.mxu0
    %v266 = vpack.c.bf16 %v263, %v260
    %267 = vst.msk [vmem:[#allocation4] sm:$0xff] %vm103, %v266
    %v268 = vld [vmem:[%s4] sm:$0xf]
    %v269 = vlaneseq
    %v270 = vshrl.u32 %v269, 7
    %v271 = vand.u32 %v270, 1
    %vm272 = vcmp.ne.s32.totalorder %v271, 0
    %v273 = vand.u32 %v270, 2
    %vm274 = vcmp.ne.s32.totalorder %v273, 0
    %v275 = vand.u32 %v270, 4
    %vm276 = vcmp.ne.s32.totalorder %v275, 0
    %v277 = vld [vmem:[#allocation2] sm:$0xff]
    %v278 = vld [vmem:[#allocation3] sm:$0xff]
    %v280 = vunpack.c.l.b16 %v278
    %v281 = vunpack.c.h.b16 %v278
    %v282 = vpack.c.b16 %v280, %v280
    %v283 = vpack.c.b16 %v281, %v281
    %v284 = vld [vmem:[#allocation4] sm:$0xff]
    %v286 = vunpack.c.l.b16 %v284
    %v287 = vunpack.c.h.b16 %v284
    %v288 = vpack.c.b16 %v286, %v286
    %v289 = vpack.c.b16 %v287, %v287
    %vm290 = vcmask 64512
    %v292 = vsel %vm290, %v277, 0
    %vm294 = vcmask 1043456
    %v296 = vsel %vm294, %v268, 0
    %298 = vmatprep.subr.bf16.mxu0 0
    %299 = vmatpush1.bf16.msra.mxu0 %v296
    %300 = vmatprep.subr.bf16.mxu0 0
    %301 = vmatpush1.bf16.msra.mxu0 0
    %302 = vmatprep.subr.bf16.mxu0 0
    %303 = vmatpush1.bf16.msra.mxu0 0
    %304 = vmatprep.subr.bf16.mxu0 0
    %305 = vmatpush1.bf16.msra.mxu0 0
    %306 = vmatprep.subr.bf16.mxu0 0
    %307 = vmatpush1.bf16.msra.mxu0 0
    %308 = vmatprep.subr.bf16.mxu0 0
    %309 = vmatpush1.bf16.msra.mxu0 0
    %310 = vmatprep.subr.bf16.mxu0 0
    %311 = vmatpush1.bf16.msra.mxu0 0
    %312 = vmatprep.subr.bf16.mxu0 0
    %313 = vmatpush1.bf16.msra.mxu0 0
    %314 = vmatprep.subr.bf16.mxu0 0
    %315 = vmatpush1.bf16.msra.mxu0 0
    %316 = vmatprep.subr.bf16.mxu0 0
    %317 = vmatpush1.bf16.msra.mxu0 0
    %318 = vmatprep.subr.bf16.mxu0 0
    %319 = vmatpush1.bf16.msra.mxu0 0
    %320 = vmatprep.subr.bf16.mxu0 0
    %321 = vmatpush1.bf16.msra.mxu0 0
    %322 = vmatprep.subr.bf16.mxu0 0
    %323 = vmatpush1.bf16.msra.mxu0 0
    %324 = vmatprep.subr.bf16.mxu0 0
    %325 = vmatpush1.bf16.msra.mxu0 0
    %326 = vmatprep.subr.bf16.mxu0 0
    %327 = vmatpush1.bf16.msra.mxu0 0
    %328 = vmatprep.subr.bf16.mxu0 0
    %329 = vmatpush1.bf16.msra.mxu0 0
    %330 = vmatprep.mubr.bf16.mxu0 0
    %331 = vmatmul.mubr.bf16.gmra.mrb[0].mxu0 %v292
    %v332 = vpop.f32.mrb[0].mxu0
    %v333 = vadd.f32 0.0, %v332
    %v334 = vpop.f32.mrb[0].mxu0
    %v335 = vpop.f32.mrb[0].mxu0
    %v336 = vadd.f32 0.0, %v335
    %v337 = vpop.f32.mrb[0].mxu0
    %338 = vdwg.mxu0
    %341 = vrot.lane.b32.xlu0 %v333, 113
    %v342 = vpop.permute.xlu0 %341
    %343 = vrot.lane.b32.xlu0 %v336, 113
    %v344 = vpop.permute.xlu0 %343
    %347 = vrot.lane.b32.xlu0 %v333, 1
    %v348 = vpop.permute.xlu0 %347
    %349 = vrot.lane.b32.xlu0 %v336, 1
    %v350 = vpop.permute.xlu0 %349
    %vm353 = vcmask 7168
    %v354 = vsel %vm353, %v342, %v348
    %v355 = vsel %vm353, %v344, %v350
    %v356 = vsel %vm272, 1, 0
    %vm357 = vcmp.eq.s32.totalorder %v356, 1
    %v358 = vsel %vm357, %v354, %v333
    %v359 = vsel %vm357, %v355, %v336
    %362 = vrot.lane.b32.xlu0 %v358, 114
    %v363 = vpop.permute.xlu0 %362
    %364 = vrot.lane.b32.xlu0 %v359, 114
    %v365 = vpop.permute.xlu0 %364
    %368 = vrot.lane.b32.xlu0 %v358, 2
    %v369 = vpop.permute.xlu0 %368
    %370 = vrot.lane.b32.xlu0 %v359, 2
    %v371 = vpop.permute.xlu0 %370
    %vm374 = vcmask 15360
    %v375 = vsel %vm374, %v363, %v369
    %v376 = vsel %vm374, %v365, %v371
    %v377 = vsel %vm274, 1, 0
    %vm378 = vcmp.eq.s32.totalorder %v377, 1
    %v379 = vsel %vm378, %v375, %v358
    %v380 = vsel %vm378, %v376, %v359
    %383 = vrot.lane.b32.xlu0 %v379, 116
    %v384 = vpop.permute.xlu0 %383
    %385 = vrot.lane.b32.xlu0 %v380, 116
    %v386 = vpop.permute.xlu0 %385
    %389 = vrot.lane.b32.xlu0 %v379, 4
    %v390 = vpop.permute.xlu0 %389
    %391 = vrot.lane.b32.xlu0 %v380, 4
    %v392 = vpop.permute.xlu0 %391
    %vm395 = vcmask 31744
    %v396 = vsel %vm395, %v384, %v390
    %v397 = vsel %vm395, %v386, %v392
    %v398 = vsel %vm276, 1, 0
    %vm399 = vcmp.eq.s32.totalorder %v398, 1
    %v400 = vsel %vm399, %v396, %v379
    %v401 = vsel %vm399, %v397, %v380
    %v403 = vunpack.c.l.b16 %v277
    %v404 = vunpack.c.h.b16 %v277
    %v405 = vpack.c.b16 %v403, %v403
    %v406 = vpack.c.b16 %v404, %v404
    %v408 = vsel %vm290, %v405, 0
    %v411 = vsel %vm290, %v282, 0
    %413 = vmatprep.subr.bf16.mxu0 0
    %414 = vmatpush1.bf16.xpose.msra.mxu0 %v411
    %415 = vmatprep.subr.bf16.mxu0 0
    %416 = vmatpush1.bf16.xpose.msra.mxu0 0
    %417 = vmatprep.subr.bf16.mxu0 0
    %418 = vmatpush1.bf16.xpose.msra.mxu0 0
    %419 = vmatprep.subr.bf16.mxu0 0
    %420 = vmatpush1.bf16.xpose.msra.mxu0 0
    %421 = vmatprep.subr.bf16.mxu0 0
    %422 = vmatpush1.bf16.xpose.msra.mxu0 0
    %423 = vmatprep.subr.bf16.mxu0 0
    %424 = vmatpush1.bf16.xpose.msra.mxu0 0
    %425 = vmatprep.subr.bf16.mxu0 0
    %426 = vmatpush1.bf16.xpose.msra.mxu0 0
    %427 = vmatprep.subr.bf16.mxu0 0
    %428 = vmatpush1.bf16.xpose.msra.mxu0 0
    %429 = vmatprep.subr.bf16.mxu0 0
    %430 = vmatpush1.bf16.xpose.msra.mxu0 0
    %431 = vmatprep.subr.bf16.mxu0 0
    %432 = vmatpush1.bf16.xpose.msra.mxu0 0
    %433 = vmatprep.subr.bf16.mxu0 0
    %434 = vmatpush1.bf16.xpose.msra.mxu0 0
    %435 = vmatprep.subr.bf16.mxu0 0
    %436 = vmatpush1.bf16.xpose.msra.mxu0 0
    %437 = vmatprep.subr.bf16.mxu0 0
    %438 = vmatpush1.bf16.xpose.msra.mxu0 0
    %439 = vmatprep.subr.bf16.mxu0 0
    %440 = vmatpush1.bf16.xpose.msra.mxu0 0
    %441 = vmatprep.subr.bf16.mxu0 0
    %442 = vmatpush1.bf16.xpose.msra.mxu0 0
    %443 = vmatprep.subr.bf16.mxu0 0
    %444 = vmatpush1.bf16.xpose.msra.mxu0 0
    %445 = vmatprep.mubr.bf16.mxu0 0
    %446 = vmatmul.mubr.bf16.gmra.mrb[0].mxu0 %v408
    %v447 = vpop.f32.mrb[0].mxu0
    %v448 = vadd.f32 %v400, %v447
    %v449 = vpop.f32.mrb[0].mxu0
    %v450 = vpop.f32.mrb[0].mxu0
    %v451 = vpop.f32.mrb[0].mxu0
    %452 = vdwg.mxu0
    %v454 = vsel %vm290, %v406, 0
    %v457 = vsel %vm290, %v283, 0
    %459 = vmatprep.subr.bf16.mxu0 0
    %460 = vmatpush1.bf16.xpose.msra.mxu0 %v457
    %461 = vmatprep.subr.bf16.mxu0 0
    %462 = vmatpush1.bf16.xpose.msra.mxu0 0
    %463 = vmatprep.subr.bf16.mxu0 0
    %464 = vmatpush1.bf16.xpose.msra.mxu0 0
    %465 = vmatprep.subr.bf16.mxu0 0
    %466 = vmatpush1.bf16.xpose.msra.mxu0 0
    %467 = vmatprep.subr.bf16.mxu0 0
    %468 = vmatpush1.bf16.xpose.msra.mxu0 0
    %469 = vmatprep.subr.bf16.mxu0 0
    %470 = vmatpush1.bf16.xpose.msra.mxu0 0
    %471 = vmatprep.subr.bf16.mxu0 0
    %472 = vmatpush1.bf16.xpose.msra.mxu0 0
    %473 = vmatprep.subr.bf16.mxu0 0
    %474 = vmatpush1.bf16.xpose.msra.mxu0 0
    %475 = vmatprep.subr.bf16.mxu0 0
    %476 = vmatpush1.bf16.xpose.msra.mxu0 0
    %477 = vmatprep.subr.bf16.mxu0 0
    %478 = vmatpush1.bf16.xpose.msra.mxu0 0
    %479 = vmatprep.subr.bf16.mxu0 0
    %480 = vmatpush1.bf16.xpose.msra.mxu0 0
    %481 = vmatprep.subr.bf16.mxu0 0
    %482 = vmatpush1.bf16.xpose.msra.mxu0 0
    %483 = vmatprep.subr.bf16.mxu0 0
    %484 = vmatpush1.bf16.xpose.msra.mxu0 0
    %485 = vmatprep.subr.bf16.mxu0 0
    %486 = vmatpush1.bf16.xpose.msra.mxu0 0
    %487 = vmatprep.subr.bf16.mxu0 0
    %488 = vmatpush1.bf16.xpose.msra.mxu0 0
    %489 = vmatprep.subr.bf16.mxu0 0
    %490 = vmatpush1.bf16.xpose.msra.mxu0 0
    %491 = vmatprep.mubr.bf16.mxu0 0
    %492 = vmatmul.mubr.bf16.gmra.mrb[0].mxu0 %v454
    %v493 = vpop.f32.mrb[0].mxu0
    %v494 = vadd.f32 %v401, %v493
    %v495 = vpop.f32.mrb[0].mxu0
    %v496 = vpop.f32.mrb[0].mxu0
    %v497 = vpop.f32.mrb[0].mxu0
    %498 = vdwg.mxu0
    %v499 = vsel %vm290, %v448, -inf
    %500 = vmax.xlane.f32.xlu0 %v499
    %v501 = vpop.xlane.xlu0 %500
    %v502 = vsel %vm290, %v494, -inf
    %503 = vmax.xlane.f32.xlu0 %v502
    %v504 = vpop.xlane.xlu0 %503
    %v505 = vsub.f32 %v448, %v501
    %v506 = vsub.f32 %v494, %v504
    %v507 = vpack.c.bf16 %v505, %v505
    %v508 = vpack.c.bf16 %v506, %v506
    %v510 = vmul.bf16 %v507, 1069105081
    %v511 = vpow.bf16.pop %v510
    %v513 = vmul.bf16 %v508, 1069105081
    %v514 = vpow.bf16.pop %v513
    %v515 = vunpack.c.l.bf16 %v511
    %v516 = vunpack.c.l.bf16 %v514
    %v517 = vsel %vm290, %v515, 0.0
    %518 = vadd.xlane.f32.xlu0 %v517
    %v519 = vpop.xlane.xlu0 %518
    %v520 = vsel %vm290, %v516, 0.0
    %521 = vadd.xlane.f32.xlu0 %v520
    %v522 = vpop.xlane.xlu0 %521
    %v523 = vrcp.pop %v519
    %v524 = vrcp.pop %v522
    %v525 = vmul.f32 %v515, %v523
    %v526 = vmul.f32 %v516, %v524
    %v527 = vpack.c.bf16 %v525, %v525
    %v528 = vpack.c.bf16 %v526, %v526
    %vm529 = vcmask 60416
    %530 = vst.msk [vmem:[#allocation14] sm:$0xf] %vm529, %v527
    %531 = vst.msk [vmem:[#allocation14 + $0x10] sm:$0xf] %vm529, %v528
    %v533 = vsel %vm290, %v527, 0
    %v536 = vsel %vm294, %v288, 0
    %538 = vmatprep.subr.bf16.mxu0 0
    %539 = vmatpush1.bf16.msra.mxu0 %v536
    %540 = vmatprep.subr.bf16.mxu0 0
    %541 = vmatpush1.bf16.msra.mxu0 0
    %542 = vmatprep.subr.bf16.mxu0 0
    %543 = vmatpush1.bf16.msra.mxu0 0
    %544 = vmatprep.subr.bf16.mxu0 0
    %545 = vmatpush1.bf16.msra.mxu0 0
    %546 = vmatprep.subr.bf16.mxu0 0
    %547 = vmatpush1.bf16.msra.mxu0 0
    %548 = vmatprep.subr.bf16.mxu0 0
    %549 = vmatpush1.bf16.msra.mxu0 0
    %550 = vmatprep.subr.bf16.mxu0 0
    %551 = vmatpush1.bf16.msra.mxu0 0
    %552 = vmatprep.subr.bf16.mxu0 0
    %553 = vmatpush1.bf16.msra.mxu0 0
    %554 = vmatprep.subr.bf16.mxu0 0
    %555 = vmatpush1.bf16.msra.mxu0 0
    %556 = vmatprep.subr.bf16.mxu0 0
    %557 = vmatpush1.bf16.msra.mxu0 0
    %558 = vmatprep.subr.bf16.mxu0 0
    %559 = vmatpush1.bf16.msra.mxu0 0
    %560 = vmatprep.subr.bf16.mxu0 0
    %561 = vmatpush1.bf16.msra.mxu0 0
    %562 = vmatprep.subr.bf16.mxu0 0
    %563 = vmatpush1.bf16.msra.mxu0 0
    %564 = vmatprep.subr.bf16.mxu0 0
    %565 = vmatpush1.bf16.msra.mxu0 0
    %566 = vmatprep.subr.bf16.mxu0 0
    %567 = vmatpush1.bf16.msra.mxu0 0
    %568 = vmatprep.subr.bf16.mxu0 0
    %569 = vmatpush1.bf16.msra.mxu0 0
    %570 = vmatprep.mubr.bf16.mxu0 0
    %571 = vmatmul.mubr.bf16.gmra.mrb[0].mxu0 %v533
    %v572 = vpop.f32.mrb[0].mxu0
    %v573 = vadd.f32 0.0, %v572
    %v574 = vpop.f32.mrb[0].mxu0
    %v575 = vpop.f32.mrb[0].mxu0
    %v576 = vpop.f32.mrb[0].mxu0
    %577 = vdwg.mxu0
    %v579 = vsel %vm290, %v528, 0
    %v582 = vsel %vm294, %v289, 0
    %584 = vmatprep.subr.bf16.mxu0 0
    %585 = vmatpush1.bf16.msra.mxu0 %v582
    %586 = vmatprep.subr.bf16.mxu0 0
    %587 = vmatpush1.bf16.msra.mxu0 0
    %588 = vmatprep.subr.bf16.mxu0 0
    %589 = vmatpush1.bf16.msra.mxu0 0
    %590 = vmatprep.subr.bf16.mxu0 0
    %591 = vmatpush1.bf16.msra.mxu0 0
    %592 = vmatprep.subr.bf16.mxu0 0
    %593 = vmatpush1.bf16.msra.mxu0 0
    %594 = vmatprep.subr.bf16.mxu0 0
    %595 = vmatpush1.bf16.msra.mxu0 0
    %596 = vmatprep.subr.bf16.mxu0 0
    %597 = vmatpush1.bf16.msra.mxu0 0
    %598 = vmatprep.subr.bf16.mxu0 0
    %599 = vmatpush1.bf16.msra.mxu0 0
    %600 = vmatprep.subr.bf16.mxu0 0
    %601 = vmatpush1.bf16.msra.mxu0 0
    %602 = vmatprep.subr.bf16.mxu0 0
    %603 = vmatpush1.bf16.msra.mxu0 0
    %604 = vmatprep.subr.bf16.mxu0 0
    %605 = vmatpush1.bf16.msra.mxu0 0
    %606 = vmatprep.subr.bf16.mxu0 0
    %607 = vmatpush1.bf16.msra.mxu0 0
    %608 = vmatprep.subr.bf16.mxu0 0
    %609 = vmatpush1.bf16.msra.mxu0 0
    %610 = vmatprep.subr.bf16.mxu0 0
    %611 = vmatpush1.bf16.msra.mxu0 0
    %612 = vmatprep.subr.bf16.mxu0 0
    %613 = vmatpush1.bf16.msra.mxu0 0
    %614 = vmatprep.subr.bf16.mxu0 0
    %615 = vmatpush1.bf16.msra.mxu0 0
    %616 = vmatprep.mubr.bf16.mxu0 0
    %617 = vmatmul.mubr.bf16.gmra.mrb[0].mxu0 %v579
    %v618 = vpop.f32.mrb[0].mxu0
    %v619 = vadd.f32 0.0, %v618
    %v620 = vpop.f32.mrb[0].mxu0
    %v621 = vpop.f32.mrb[0].mxu0
    %v622 = vpop.f32.mrb[0].mxu0
    %623 = vdwg.mxu0
    %v624 = vld [vmem:[#allocation2] sm:$0xff]
    %v625 = vld [vmem:[#allocation3] sm:$0xff]
    %v627 = vunpack.c.l.b16 %v625
    %v628 = vunpack.c.h.b16 %v625
    %v629 = vld [vmem:[#allocation4] sm:$0xff]
    %v631 = vunpack.c.l.b16 %v629
    %v632 = vunpack.c.h.b16 %v629
    %634 = vrot.lane.b32.xlu0 %v624, 120
    %v635 = vpop.permute.xlu0 %634
    %v637 = vsel %vm290, %v635, 0
    %639 = vmatprep.subr.bf16.mxu0 0
    %640 = vmatpush1.bf16.msra.mxu0 %v296
    %641 = vmatprep.subr.bf16.mxu0 0
    %642 = vmatpush1.bf16.msra.mxu0 0
    %643 = vmatprep.subr.bf16.mxu0 0
    %644 = vmatpush1.bf16.msra.mxu0 0
    %645 = vmatprep.subr.bf16.mxu0 0
    %646 = vmatpush1.bf16.msra.mxu0 0
    %647 = vmatprep.subr.bf16.mxu0 0
    %648 = vmatpush1.bf16.msra.mxu0 0
    %649 = vmatprep.subr.bf16.mxu0 0
    %650 = vmatpush1.bf16.msra.mxu0 0
    %651 = vmatprep.subr.bf16.mxu0 0
    %652 = vmatpush1.bf16.msra.mxu0 0
    %653 = vmatprep.subr.bf16.mxu0 0
    %654 = vmatpush1.bf16.msra.mxu0 0
    %655 = vmatprep.subr.bf16.mxu0 0
    %656 = vmatpush1.bf16.msra.mxu0 0
    %657 = vmatprep.subr.bf16.mxu0 0
    %658 = vmatpush1.bf16.msra.mxu0 0
    %659 = vmatprep.subr.bf16.mxu0 0
    %660 = vmatpush1.bf16.msra.mxu0 0
    %661 = vmatprep.subr.bf16.mxu0 0
    %662 = vmatpush1.bf16.msra.mxu0 0
    %663 = vmatprep.subr.bf16.mxu0 0
    %664 = vmatpush1.bf16.msra.mxu0 0
    %665 = vmatprep.subr.bf16.mxu0 0
    %666 = vmatpush1.bf16.msra.mxu0 0
    %667 = vmatprep.subr.bf16.mxu0 0
    %668 = vmatpush1.bf16.msra.mxu0 0
    %669 = vmatprep.subr.bf16.mxu0 0
    %670 = vmatpush1.bf16.msra.mxu0 0
    %671 = vmatprep.mubr.bf16.mxu0 0
    %672 = vmatmul.mubr.bf16.gmra.mrb[0].mxu0 %v637
    %v673 = vpop.f32.mrb[0].mxu0
    %v674 = vadd.f32 0.0, %v673
    %v675 = vpop.f32.mrb[0].mxu0
    %v676 = vpop.f32.mrb[0].mxu0
    %v677 = vadd.f32 0.0, %v676
    %v678 = vpop.f32.mrb[0].mxu0
    %679 = vdwg.mxu0
    %682 = vrot.lane.b32.xlu0 %v674, 113
    %v683 = vpop.permute.xlu0 %682
    %684 = vrot.lane.b32.xlu0 %v677, 113
    %v685 = vpop.permute.xlu0 %684
    %688 = vrot.lane.b32.xlu0 %v674, 1
    %v689 = vpop.permute.xlu0 %688
    %690 = vrot.lane.b32.xlu0 %v677, 1
    %v691 = vpop.permute.xlu0 %690
    %v694 = vsel %vm353, %v683, %v689
    %v695 = vsel %vm353, %v685, %v691
    %v696 = vsel %vm357, %v694, %v674
    %v697 = vsel %vm357, %v695, %v677
    %700 = vrot.lane.b32.xlu0 %v696, 114
    %v701 = vpop.permute.xlu0 %700
    %702 = vrot.lane.b32.xlu0 %v697, 114
    %v703 = vpop.permute.xlu0 %702
    %706 = vrot.lane.b32.xlu0 %v696, 2
    %v707 = vpop.permute.xlu0 %706
    %708 = vrot.lane.b32.xlu0 %v697, 2
    %v709 = vpop.permute.xlu0 %708
    %v712 = vsel %vm374, %v701, %v707
    %v713 = vsel %vm374, %v703, %v709
    %v714 = vsel %vm378, %v712, %v696
    %v715 = vsel %vm378, %v713, %v697
    %718 = vrot.lane.b32.xlu0 %v714, 116
    %v719 = vpop.permute.xlu0 %718
    %720 = vrot.lane.b32.xlu0 %v715, 116
    %v721 = vpop.permute.xlu0 %720
    %724 = vrot.lane.b32.xlu0 %v714, 4
    %v725 = vpop.permute.xlu0 %724
    %726 = vrot.lane.b32.xlu0 %v715, 4
    %v727 = vpop.permute.xlu0 %726
    %v730 = vsel %vm395, %v719, %v725
    %v731 = vsel %vm395, %v721, %v727
    %v732 = vsel %vm399, %v730, %v714
    %v733 = vsel %vm399, %v731, %v715
    %v734 = vunpack.c.l.b16 %v624
    %v735 = vunpack.c.h.b16 %v624
    %v736 = vpack.c.b16 %v734, %v734
    %737 = vrot.lane.b32.xlu0 %v736, 120
    %v738 = vpop.permute.xlu0 %737
    %v739 = vpack.c.b16 %v627, %v627
    %740 = vrot.lane.b32.xlu0 %v739, 120
    %v741 = vpop.permute.xlu0 %740
    %v743 = vsel %vm290, %v738, 0
    %v746 = vsel %vm290, %v741, 0
    %748 = vmatprep.subr.bf16.mxu0 0
    %749 = vmatpush1.bf16.xpose.msra.mxu0 %v746
    %750 = vmatprep.subr.bf16.mxu0 0
    %751 = vmatpush1.bf16.xpose.msra.mxu0 0
    %752 = vmatprep.subr.bf16.mxu0 0
    %753 = vmatpush1.bf16.xpose.msra.mxu0 0
    %754 = vmatprep.subr.bf16.mxu0 0
    %755 = vmatpush1.bf16.xpose.msra.mxu0 0
    %756 = vmatprep.subr.bf16.mxu0 0
    %757 = vmatpush1.bf16.xpose.msra.mxu0 0
    %758 = vmatprep.subr.bf16.mxu0 0
    %759 = vmatpush1.bf16.xpose.msra.mxu0 0
    %760 = vmatprep.subr.bf16.mxu0 0
    %761 = vmatpush1.bf16.xpose.msra.mxu0 0
    %762 = vmatprep.subr.bf16.mxu0 0
    %763 = vmatpush1.bf16.xpose.msra.mxu0 0
    %764 = vmatprep.subr.bf16.mxu0 0
    %765 = vmatpush1.bf16.xpose.msra.mxu0 0
    %766 = vmatprep.subr.bf16.mxu0 0
    %767 = vmatpush1.bf16.xpose.msra.mxu0 0
    %768 = vmatprep.subr.bf16.mxu0 0
    %769 = vmatpush1.bf16.xpose.msra.mxu0 0
    %770 = vmatprep.subr.bf16.mxu0 0
    %771 = vmatpush1.bf16.xpose.msra.mxu0 0
    %772 = vmatprep.subr.bf16.mxu0 0
    %773 = vmatpush1.bf16.xpose.msra.mxu0 0
    %774 = vmatprep.subr.bf16.mxu0 0
    %775 = vmatpush1.bf16.xpose.msra.mxu0 0
    %776 = vmatprep.subr.bf16.mxu0 0
    %777 = vmatpush1.bf16.xpose.msra.mxu0 0
    %778 = vmatprep.subr.bf16.mxu0 0
    %779 = vmatpush1.bf16.xpose.msra.mxu0 0
    %780 = vmatprep.mubr.bf16.mxu0 0
    %781 = vmatmul.mubr.bf16.gmra.mrb[0].mxu0 %v743
    %v782 = vpop.f32.mrb[0].mxu0
    %v783 = vadd.f32 %v732, %v782
    %v784 = vpop.f32.mrb[0].mxu0
    %v785 = vpop.f32.mrb[0].mxu0
    %v786 = vpop.f32.mrb[0].mxu0
    %787 = vdwg.mxu0
    %v788 = vpack.c.b16 %v735, %v735
    %789 = vrot.lane.b32.xlu0 %v788, 120
    %v790 = vpop.permute.xlu0 %789
    %v791 = vpack.c.b16 %v628, %v628
    %792 = vrot.lane.b32.xlu0 %v791, 120
    %v793 = vpop.permute.xlu0 %792
    %v795 = vsel %vm290, %v790, 0
    %v798 = vsel %vm290, %v793, 0
    %800 = vmatprep.subr.bf16.mxu0 0
    %801 = vmatpush1.bf16.xpose.msra.mxu0 %v798
    %802 = vmatprep.subr.bf16.mxu0 0
    %803 = vmatpush1.bf16.xpose.msra.mxu0 0
    %804 = vmatprep.subr.bf16.mxu0 0
    %805 = vmatpush1.bf16.xpose.msra.mxu0 0
    %806 = vmatprep.subr.bf16.mxu0 0
    %807 = vmatpush1.bf16.xpose.msra.mxu0 0
    %808 = vmatprep.subr.bf16.mxu0 0
    %809 = vmatpush1.bf16.xpose.msra.mxu0 0
    %810 = vmatprep.subr.bf16.mxu0 0
    %811 = vmatpush1.bf16.xpose.msra.mxu0 0
    %812 = vmatprep.subr.bf16.mxu0 0
    %813 = vmatpush1.bf16.xpose.msra.mxu0 0
    %814 = vmatprep.subr.bf16.mxu0 0
    %815 = vmatpush1.bf16.xpose.msra.mxu0 0
    %816 = vmatprep.subr.bf16.mxu0 0
    %817 = vmatpush1.bf16.xpose.msra.mxu0 0
    %818 = vmatprep.subr.bf16.mxu0 0
    %819 = vmatpush1.bf16.xpose.msra.mxu0 0
    %820 = vmatprep.subr.bf16.mxu0 0
    %821 = vmatpush1.bf16.xpose.msra.mxu0 0
    %822 = vmatprep.subr.bf16.mxu0 0
    %823 = vmatpush1.bf16.xpose.msra.mxu0 0
    %824 = vmatprep.subr.bf16.mxu0 0
    %825 = vmatpush1.bf16.xpose.msra.mxu0 0
    %826 = vmatprep.subr.bf16.mxu0 0
    %827 = vmatpush1.bf16.xpose.msra.mxu0 0
    %828 = vmatprep.subr.bf16.mxu0 0
    %829 = vmatpush1.bf16.xpose.msra.mxu0 0
    %830 = vmatprep.subr.bf16.mxu0 0
    %831 = vmatpush1.bf16.xpose.msra.mxu0 0
    %832 = vmatprep.mubr.bf16.mxu0 0
    %833 = vmatmul.mubr.bf16.gmra.mrb[0].mxu0 %v795
    %v834 = vpop.f32.mrb[0].mxu0
    %v835 = vadd.f32 %v733, %v834
    %v836 = vpop.f32.mrb[0].mxu0
    %v837 = vpop.f32.mrb[0].mxu0
    %v838 = vpop.f32.mrb[0].mxu0
    %839 = vdwg.mxu0
    %v840 = vsel %vm290, %v783, -inf
    %841 = vmax.xlane.f32.xlu0 %v840
    %v842 = vpop.xlane.xlu0 %841
    %v843 = vsel %vm290, %v835, -inf
    %844 = vmax.xlane.f32.xlu0 %v843
    %v845 = vpop.xlane.xlu0 %844
    %v846 = vsub.f32 %v783, %v842
    %v847 = vsub.f32 %v835, %v845
    %v848 = vpack.c.bf16 %v846, %v846
    %v849 = vpack.c.bf16 %v847, %v847
    %v851 = vmul.bf16 %v848, 1069105081
    %v852 = vpow.bf16.pop %v851
    %v854 = vmul.bf16 %v849, 1069105081
    %v855 = vpow.bf16.pop %v854
    %v856 = vunpack.c.l.bf16 %v852
    %v857 = vunpack.c.l.bf16 %v855
    %v858 = vsel %vm290, %v856, 0.0
    %859 = vadd.xlane.f32.xlu0 %v858
    %v860 = vpop.xlane.xlu0 %859
    %v861 = vsel %vm290, %v857, 0.0
    %862 = vadd.xlane.f32.xlu0 %v861
    %v863 = vpop.xlane.xlu0 %862
    %v864 = vrcp.pop %v860
    %v865 = vrcp.pop %v863
    %v866 = vmul.f32 %v856, %v864
    %v867 = vmul.f32 %v857, %v865
    %v868 = vpack.c.bf16 %v866, %v866
    %v869 = vpack.c.bf16 %v867, %v867
    %s870 = scalar_lea.vmem [#allocation14], 4
    %871 = vst.msk [vmem:[%s870] sm:$0xf] %vm529, %v868
    %872 = vst.msk [vmem:[%s870 + $0x10] sm:$0xf] %vm529, %v869
    %v873 = vpack.c.b16 %v631, %v631
    %874 = vrot.lane.b32.xlu0 %v873, 120
    %v875 = vpop.permute.xlu0 %874
    %v877 = vsel %vm290, %v868, 0
    %v880 = vsel %vm294, %v875, 0
    %882 = vmatprep.subr.bf16.mxu0 0
    %883 = vmatpush1.bf16.msra.mxu0 %v880
    %884 = vmatprep.subr.bf16.mxu0 0
    %885 = vmatpush1.bf16.msra.mxu0 0
    %886 = vmatprep.subr.bf16.mxu0 0
    %887 = vmatpush1.bf16.msra.mxu0 0
    %888 = vmatprep.subr.bf16.mxu0 0
    %889 = vmatpush1.bf16.msra.mxu0 0
    %890 = vmatprep.subr.bf16.mxu0 0
    %891 = vmatpush1.bf16.msra.mxu0 0
    %892 = vmatprep.subr.bf16.mxu0 0
    %893 = vmatpush1.bf16.msra.mxu0 0
    %894 = vmatprep.subr.bf16.mxu0 0
    %895 = vmatpush1.bf16.msra.mxu0 0
    %896 = vmatprep.subr.bf16.mxu0 0
    %897 = vmatpush1.bf16.msra.mxu0 0
    %898 = vmatprep.subr.bf16.mxu0 0
    %899 = vmatpush1.bf16.msra.mxu0 0
    %900 = vmatprep.subr.bf16.mxu0 0
    %901 = vmatpush1.bf16.msra.mxu0 0
    %902 = vmatprep.subr.bf16.mxu0 0
    %903 = vmatpush1.bf16.msra.mxu0 0
    %904 = vmatprep.subr.bf16.mxu0 0
    %905 = vmatpush1.bf16.msra.mxu0 0
    %906 = vmatprep.subr.bf16.mxu0 0
    %907 = vmatpush1.bf16.msra.mxu0 0
    %908 = vmatprep.subr.bf16.mxu0 0
    %909 = vmatpush1.bf16.msra.mxu0 0
    %910 = vmatprep.subr.bf16.mxu0 0
    %911 = vmatpush1.bf16.msra.mxu0 0
    %912 = vmatprep.subr.bf16.mxu0 0
    %913 = vmatpush1.bf16.msra.mxu0 0
    %914 = vmatprep.mubr.bf16.mxu0 0
    %915 = vmatmul.mubr.bf16.gmra.mrb[0].mxu0 %v877
    %v916 = vpop.f32.mrb[0].mxu0
    %v917 = vadd.f32 0.0, %v916
    %v918 = vpop.f32.mrb[0].mxu0
    %v919 = vpop.f32.mrb[0].mxu0
    %v920 = vpop.f32.mrb[0].mxu0
    %921 = vdwg.mxu0
    %v922 = vpack.c.b16 %v632, %v632
    %923 = vrot.lane.b32.xlu0 %v922, 120
    %v924 = vpop.permute.xlu0 %923
    %v926 = vsel %vm290, %v869, 0
    %v929 = vsel %vm294, %v924, 0
    %931 = vmatprep.subr.bf16.mxu0 0
    %932 = vmatpush1.bf16.msra.mxu0 %v929
    %933 = vmatprep.subr.bf16.mxu0 0
    %934 = vmatpush1.bf16.msra.mxu0 0
    %935 = vmatprep.subr.bf16.mxu0 0
    %936 = vmatpush1.bf16.msra.mxu0 0
    %937 = vmatprep.subr.bf16.mxu0 0
    %938 = vmatpush1.bf16.msra.mxu0 0
    %939 = vmatprep.subr.bf16.mxu0 0
    %940 = vmatpush1.bf16.msra.mxu0 0
    %941 = vmatprep.subr.bf16.mxu0 0
    %942 = vmatpush1.bf16.msra.mxu0 0
    %943 = vmatprep.subr.bf16.mxu0 0
    %944 = vmatpush1.bf16.msra.mxu0 0
    %945 = vmatprep.subr.bf16.mxu0 0
    %946 = vmatpush1.bf16.msra.mxu0 0
    %947 = vmatprep.subr.bf16.mxu0 0
    %948 = vmatpush1.bf16.msra.mxu0 0
    %949 = vmatprep.subr.bf16.mxu0 0
    %950 = vmatpush1.bf16.msra.mxu0 0
    %951 = vmatprep.subr.bf16.mxu0 0
    %952 = vmatpush1.bf16.msra.mxu0 0
    %953 = vmatprep.subr.bf16.mxu0 0
    %954 = vmatpush1.bf16.msra.mxu0 0
    %955 = vmatprep.subr.bf16.mxu0 0
    %956 = vmatpush1.bf16.msra.mxu0 0
    %957 = vmatprep.subr.bf16.mxu0 0
    %958 = vmatpush1.bf16.msra.mxu0 0
    %959 = vmatprep.subr.bf16.mxu0 0
    %960 = vmatpush1.bf16.msra.mxu0 0
    %961 = vmatprep.subr.bf16.mxu0 0
    %962 = vmatpush1.bf16.msra.mxu0 0
    %963 = vmatprep.mubr.bf16.mxu0 0
    %964 = vmatmul.mubr.bf16.gmra.mrb[0].mxu0 %v926
    %v965 = vpop.f32.mrb[0].mxu0
    %v966 = vadd.f32 0.0, %v965
    %v967 = vpop.f32.mrb[0].mxu0
    %v968 = vpop.f32.mrb[0].mxu0
    %v969 = vpop.f32.mrb[0].mxu0
    %970 = vdwg.mxu0
    %v971 = vld [vmem:[#allocation2] sm:$0xff]
    %v972 = vld [vmem:[#allocation3] sm:$0xff]
    %v974 = vunpack.c.l.b16 %v972
    %v975 = vunpack.c.h.b16 %v972
    %v976 = vld [vmem:[#allocation4] sm:$0xff]
    %v978 = vunpack.c.l.b16 %v976
    %v979 = vunpack.c.h.b16 %v976
    %981 = vrot.lane.b32.xlu0 %v971, 112
    %v982 = vpop.permute.xlu0 %981
    %v984 = vsel %vm290, %v982, 0
    %986 = vmatprep.subr.bf16.mxu0 0
    %987 = vmatpush1.bf16.msra.mxu0 %v296
    %988 = vmatprep.subr.bf16.mxu0 0
    %989 = vmatpush1.bf16.msra.mxu0 0
    %990 = vmatprep.subr.bf16.mxu0 0
    %991 = vmatpush1.bf16.msra.mxu0 0
    %992 = vmatprep.subr.bf16.mxu0 0
    %993 = vmatpush1.bf16.msra.mxu0 0
    %994 = vmatprep.subr.bf16.mxu0 0
    %995 = vmatpush1.bf16.msra.mxu0 0
    %996 = vmatprep.subr.bf16.mxu0 0
    %997 = vmatpush1.bf16.msra.mxu0 0
    %998 = vmatprep.subr.bf16.mxu0 0
    %999 = vmatpush1.bf16.msra.mxu0 0
    %1000 = vmatprep.subr.bf16.mxu0 0
    %1001 = vmatpush1.bf16.msra.mxu0 0
    %1002 = vmatprep.subr.bf16.mxu0 0
    %1003 = vmatpush1.bf16.msra.mxu0 0
    %1004 = vmatprep.subr.bf16.mxu0 0
    %1005 = vmatpush1.bf16.msra.mxu0 0
    %1006 = vmatprep.subr.bf16.mxu0 0
    %1007 = vmatpush1.bf16.msra.mxu0 0
    %1008 = vmatprep.subr.bf16.mxu0 0
    %1009 = vmatpush1.bf16.msra.mxu0 0
    %1010 = vmatprep.subr.bf16.mxu0 0
    %1011 = vmatpush1.bf16.msra.mxu0 0
    %1012 = vmatprep.subr.bf16.mxu0 0
    %1013 = vmatpush1.bf16.msra.mxu0 0
    %1014 = vmatprep.subr.bf16.mxu0 0
    %1015 = vmatpush1.bf16.msra.mxu0 0
    %1016 = vmatprep.subr.bf16.mxu0 0
    %1017 = vmatpush1.bf16.msra.mxu0 0
    %1018 = vmatprep.mubr.bf16.mxu0 0
    %1019 = vmatmul.mubr.bf16.gmra.mrb[0].mxu0 %v984
    %v1020 = vpop.f32.mrb[0].mxu0
    %v1021 = vadd.f32 0.0, %v1020
    %v1022 = vpop.f32.mrb[0].mxu0
    %v1023 = vpop.f32.mrb[0].mxu0
    %v1024 = vadd.f32 0.0, %v1023
    %v1025 = vpop.f32.mrb[0].mxu0
    %1026 = vdwg.mxu0
    %1029 = vrot.lane.b32.xlu0 %v1021, 113
    %v1030 = vpop.permute.xlu0 %1029
    %1031 = vrot.lane.b32.xlu0 %v1024, 113
    %v1032 = vpop.permute.xlu0 %1031
    %1035 = vrot.lane.b32.xlu0 %v1021, 1
    %v1036 = vpop.permute.xlu0 %1035
    %1037 = vrot.lane.b32.xlu0 %v1024, 1
    %v1038 = vpop.permute.xlu0 %1037
    %v1041 = vsel %vm353, %v1030, %v1036
    %v1042 = vsel %vm353, %v1032, %v1038
    %v1043 = vsel %vm357, %v1041, %v1021
    %v1044 = vsel %vm357, %v1042, %v1024
    %1047 = vrot.lane.b32.xlu0 %v1043, 114
    %v1048 = vpop.permute.xlu0 %1047
    %1049 = vrot.lane.b32.xlu0 %v1044, 114
    %v1050 = vpop.permute.xlu0 %1049
    %1053 = vrot.lane.b32.xlu0 %v1043, 2
    %v1054 = vpop.permute.xlu0 %1053
    %1055 = vrot.lane.b32.xlu0 %v1044, 2
    %v1056 = vpop.permute.xlu0 %1055
    %v1059 = vsel %vm374, %v1048, %v1054
    %v1060 = vsel %vm374, %v1050, %v1056
    %v1061 = vsel %vm378, %v1059, %v1043
    %v1062 = vsel %vm378, %v1060, %v1044
    %1065 = vrot.lane.b32.xlu0 %v1061, 116
    %v1066 = vpop.permute.xlu0 %1065
    %1067 = vrot.lane.b32.xlu0 %v1062, 116
    %v1068 = vpop.permute.xlu0 %1067
    %1071 = vrot.lane.b32.xlu0 %v1061, 4
    %v1072 = vpop.permute.xlu0 %1071
    %1073 = vrot.lane.b32.xlu0 %v1062, 4
    %v1074 = vpop.permute.xlu0 %1073
    %v1077 = vsel %vm395, %v1066, %v1072
    %v1078 = vsel %vm395, %v1068, %v1074
    %v1079 = vsel %vm399, %v1077, %v1061
    %v1080 = vsel %vm399, %v1078, %v1062
    %v1081 = vunpack.c.l.b16 %v971
    %v1082 = vunpack.c.h.b16 %v971
    %v1083 = vpack.c.b16 %v1081, %v1081
    %1084 = vrot.lane.b32.xlu0 %v1083, 112
    %v1085 = vpop.permute.xlu0 %1084
    %v1086 = vpack.c.b16 %v974, %v974
    %1087 = vrot.lane.b32.xlu0 %v1086, 112
    %v1088 = vpop.permute.xlu0 %1087
    %v1090 = vsel %vm290, %v1085, 0
    %v1093 = vsel %vm290, %v1088, 0
    %1095 = vmatprep.subr.bf16.mxu0 0
    %1096 = vmatpush1.bf16.xpose.msra.mxu0 %v1093
    %1097 = vmatprep.subr.bf16.mxu0 0
    %1098 = vmatpush1.bf16.xpose.msra.mxu0 0
    %1099 = vmatprep.subr.bf16.mxu0 0
    %1100 = vmatpush1.bf16.xpose.msra.mxu0 0
    %1101 = vmatprep.subr.bf16.mxu0 0
    %1102 = vmatpush1.bf16.xpose.msra.mxu0 0
    %1103 = vmatprep.subr.bf16.mxu0 0
    %1104 = vmatpush1.bf16.xpose.msra.mxu0 0
    %1105 = vmatprep.subr.bf16.mxu0 0
    %1106 = vmatpush1.bf16.xpose.msra.mxu0 0
    %1107 = vmatprep.subr.bf16.mxu0 0
    %1108 = vmatpush1.bf16.xpose.msra.mxu0 0
    %1109 = vmatprep.subr.bf16.mxu0 0
    %1110 = vmatpush1.bf16.xpose.msra.mxu0 0
    %1111 = vmatprep.subr.bf16.mxu0 0
    %1112 = vmatpush1.bf16.xpose.msra.mxu0 0
    %1113 = vmatprep.subr.bf16.mxu0 0
    %1114 = vmatpush1.bf16.xpose.msra.mxu0 0
    %1115 = vmatprep.subr.bf16.mxu0 0
    %1116 = vmatpush1.bf16.xpose.msra.mxu0 0
    %1117 = vmatprep.subr.bf16.mxu0 0
    %1118 = vmatpush1.bf16.xpose.msra.mxu0 0
    %1119 = vmatprep.subr.bf16.mxu0 0
    %1120 = vmatpush1.bf16.xpose.msra.mxu0 0
    %1121 = vmatprep.subr.bf16.mxu0 0
    %1122 = vmatpush1.bf16.xpose.msra.mxu0 0
    %1123 = vmatprep.subr.bf16.mxu0 0
    %1124 = vmatpush1.bf16.xpose.msra.mxu0 0
    %1125 = vmatprep.subr.bf16.mxu0 0
    %1126 = vmatpush1.bf16.xpose.msra.mxu0 0
    %1127 = vmatprep.mubr.bf16.mxu0 0
    %1128 = vmatmul.mubr.bf16.gmra.mrb[0].mxu0 %v1090
    %v1129 = vpop.f32.mrb[0].mxu0
    %v1130 = vadd.f32 %v1079, %v1129
    %v1131 = vpop.f32.mrb[0].mxu0
    %v1132 = vpop.f32.mrb[0].mxu0
    %v1133 = vpop.f32.mrb[0].mxu0
    %1134 = vdwg.mxu0
    %v1135 = vpack.c.b16 %v1082, %v1082
    %1136 = vrot.lane.b32.xlu0 %v1135, 112
    %v1137 = vpop.permute.xlu0 %1136
    %v1138 = vpack.c.b16 %v975, %v975
    %1139 = vrot.lane.b32.xlu0 %v1138, 112
    %v1140 = vpop.permute.xlu0 %1139
    %v1142 = vsel %vm290, %v1137, 0
    %v1145 = vsel %vm290, %v1140, 0
    %1147 = vmatprep.subr.bf16.mxu0 0
    %1148 = vmatpush1.bf16.xpose.msra.mxu0 %v1145
    %1149 = vmatprep.subr.bf16.mxu0 0
    %1150 = vmatpush1.bf16.xpose.msra.mxu0 0
    %1151 = vmatprep.subr.bf16.mxu0 0
    %1152 = vmatpush1.bf16.xpose.msra.mxu0 0
    %1153 = vmatprep.subr.bf16.mxu0 0
    %1154 = vmatpush1.bf16.xpose.msra.mxu0 0
    %1155 = vmatprep.subr.bf16.mxu0 0
    %1156 = vmatpush1.bf16.xpose.msra.mxu0 0
    %1157 = vmatprep.subr.bf16.mxu0 0
    %1158 = vmatpush1.bf16.xpose.msra.mxu0 0
    %1159 = vmatprep.subr.bf16.mxu0 0
    %1160 = vmatpush1.bf16.xpose.msra.mxu0 0
    %1161 = vmatprep.subr.bf16.mxu0 0
    %1162 = vmatpush1.bf16.xpose.msra.mxu0 0
    %1163 = vmatprep.subr.bf16.mxu0 0
    %1164 = vmatpush1.bf16.xpose.msra.mxu0 0
    %1165 = vmatprep.subr.bf16.mxu0 0
    %1166 = vmatpush1.bf16.xpose.msra.mxu0 0
    %1167 = vmatprep.subr.bf16.mxu0 0
    %1168 = vmatpush1.bf16.xpose.msra.mxu0 0
    %1169 = vmatprep.subr.bf16.mxu0 0
    %1170 = vmatpush1.bf16.xpose.msra.mxu0 0
    %1171 = vmatprep.subr.bf16.mxu0 0
    %1172 = vmatpush1.bf16.xpose.msra.mxu0 0
    %1173 = vmatprep.subr.bf16.mxu0 0
    %1174 = vmatpush1.bf16.xpose.msra.mxu0 0
    %1175 = vmatprep.subr.bf16.mxu0 0
    %1176 = vmatpush1.bf16.xpose.msra.mxu0 0
    %1177 = vmatprep.subr.bf16.mxu0 0
    %1178 = vmatpush1.bf16.xpose.msra.mxu0 0
    %1179 = vmatprep.mubr.bf16.mxu0 0
    %1180 = vmatmul.mubr.bf16.gmra.mrb[0].mxu0 %v1142
    %v1181 = vpop.f32.mrb[0].mxu0
    %v1182 = vadd.f32 %v1080, %v1181
    %v1183 = vpop.f32.mrb[0].mxu0
    %v1184 = vpop.f32.mrb[0].mxu0
    %v1185 = vpop.f32.mrb[0].mxu0
    %1186 = vdwg.mxu0
    %v1187 = vsel %vm290, %v1130, -inf
    %1188 = vmax.xlane.f32.xlu0 %v1187
    %v1189 = vpop.xlane.xlu0 %1188
    %v1190 = vsel %vm290, %v1182, -inf
    %1191 = vmax.xlane.f32.xlu0 %v1190
    %v1192 = vpop.xlane.xlu0 %1191
    %v1193 = vsub.f32 %v1130, %v1189
    %v1194 = vsub.f32 %v1182, %v1192
    %v1195 = vpack.c.bf16 %v1193, %v1193
    %v1196 = vpack.c.bf16 %v1194, %v1194
    %v1198 = vmul.bf16 %v1195, 1069105081
    %v1199 = vpow.bf16.pop %v1198
    %v1201 = vmul.bf16 %v1196, 1069105081
    %v1202 = vpow.bf16.pop %v1201
    %v1203 = vunpack.c.l.bf16 %v1199
    %v1204 = vunpack.c.l.bf16 %v1202
    %v1205 = vsel %vm290, %v1203, 0.0
    %1206 = vadd.xlane.f32.xlu0 %v1205
    %v1207 = vpop.xlane.xlu0 %1206
    %v1208 = vsel %vm290, %v1204, 0.0
    %1209 = vadd.xlane.f32.xlu0 %v1208
    %v1210 = vpop.xlane.xlu0 %1209
    %v1211 = vrcp.pop %v1207
    %v1212 = vrcp.pop %v1210
    %v1213 = vmul.f32 %v1203, %v1211
    %v1214 = vmul.f32 %v1204, %v1212
    %v1215 = vpack.c.bf16 %v1213, %v1213
    %v1216 = vpack.c.bf16 %v1214, %v1214
    %s1217 = scalar_lea.vmem [#allocation14], 8
    %1218 = vst.msk [vmem:[%s1217] sm:$0xf] %vm529, %v1215
    %1219 = vst.msk [vmem:[%s1217 + $0x10] sm:$0xf] %vm529, %v1216
    %v1220 = vpack.c.b16 %v978, %v978
    %1221 = vrot.lane.b32.xlu0 %v1220, 112
    %v1222 = vpop.permute.xlu0 %1221
    %v1224 = vsel %vm290, %v1215, 0
    %v1227 = vsel %vm294, %v1222, 0
    %1229 = vmatprep.subr.bf16.mxu0 0
    %1230 = vmatpush1.bf16.msra.mxu0 %v1227
    %1231 = vmatprep.subr.bf16.mxu0 0
    %1232 = vmatpush1.bf16.msra.mxu0 0
    %1233 = vmatprep.subr.bf16.mxu0 0
    %1234 = vmatpush1.bf16.msra.mxu0 0
    %1235 = vmatprep.subr.bf16.mxu0 0
    %1236 = vmatpush1.bf16.msra.mxu0 0
    %1237 = vmatprep.subr.bf16.mxu0 0
    %1238 = vmatpush1.bf16.msra.mxu0 0
    %1239 = vmatprep.subr.bf16.mxu0 0
    %1240 = vmatpush1.bf16.msra.mxu0 0
    %1241 = vmatprep.subr.bf16.mxu0 0
    %1242 = vmatpush1.bf16.msra.mxu0 0
    %1243 = vmatprep.subr.bf16.mxu0 0
    %1244 = vmatpush1.bf16.msra.mxu0 0
    %1245 = vmatprep.subr.bf16.mxu0 0
    %1246 = vmatpush1.bf16.msra.mxu0 0
    %1247 = vmatprep.subr.bf16.mxu0 0
    %1248 = vmatpush1.bf16.msra.mxu0 0
    %1249 = vmatprep.subr.bf16.mxu0 0
    %1250 = vmatpush1.bf16.msra.mxu0 0
    %1251 = vmatprep.subr.bf16.mxu0 0
    %1252 = vmatpush1.bf16.msra.mxu0 0
    %1253 = vmatprep.subr.bf16.mxu0 0
    %1254 = vmatpush1.bf16.msra.mxu0 0
    %1255 = vmatprep.subr.bf16.mxu0 0
    %1256 = vmatpush1.bf16.msra.mxu0 0
    %1257 = vmatprep.subr.bf16.mxu0 0
    %1258 = vmatpush1.bf16.msra.mxu0 0
    %1259 = vmatprep.subr.bf16.mxu0 0
    %1260 = vmatpush1.bf16.msra.mxu0 0
    %1261 = vmatprep.mubr.bf16.mxu0 0
    %1262 = vmatmul.mubr.bf16.gmra.mrb[0].mxu0 %v1224
    %v1263 = vpop.f32.mrb[0].mxu0
    %v1264 = vadd.f32 0.0, %v1263
    %v1265 = vpop.f32.mrb[0].mxu0
    %v1266 = vpop.f32.mrb[0].mxu0
    %v1267 = vpop.f32.mrb[0].mxu0
    %1268 = vdwg.mxu0
    %v1269 = vpack.c.b16 %v979, %v979
    %1270 = vrot.lane.b32.xlu0 %v1269, 112
    %v1271 = vpop.permute.xlu0 %1270
    %v1273 = vsel %vm290, %v1216, 0
    %v1276 = vsel %vm294, %v1271, 0
    %1278 = vmatprep.subr.bf16.mxu0 0
    %1279 = vmatpush1.bf16.msra.mxu0 %v1276
    %1280 = vmatprep.subr.bf16.mxu0 0
    %1281 = vmatpush1.bf16.msra.mxu0 0
    %1282 = vmatprep.subr.bf16.mxu0 0
    %1283 = vmatpush1.bf16.msra.mxu0 0
    %1284 = vmatprep.subr.bf16.mxu0 0
    %1285 = vmatpush1.bf16.msra.mxu0 0
    %1286 = vmatprep.subr.bf16.mxu0 0
    %1287 = vmatpush1.bf16.msra.mxu0 0
    %1288 = vmatprep.subr.bf16.mxu0 0
    %1289 = vmatpush1.bf16.msra.mxu0 0
    %1290 = vmatprep.subr.bf16.mxu0 0
    %1291 = vmatpush1.bf16.msra.mxu0 0
    %1292 = vmatprep.subr.bf16.mxu0 0
    %1293 = vmatpush1.bf16.msra.mxu0 0
    %1294 = vmatprep.subr.bf16.mxu0 0
    %1295 = vmatpush1.bf16.msra.mxu0 0
    %1296 = vmatprep.subr.bf16.mxu0 0
    %1297 = vmatpush1.bf16.msra.mxu0 0
    %1298 = vmatprep.subr.bf16.mxu0 0
    %1299 = vmatpush1.bf16.msra.mxu0 0
    %1300 = vmatprep.subr.bf16.mxu0 0
    %1301 = vmatpush1.bf16.msra.mxu0 0
    %1302 = vmatprep.subr.bf16.mxu0 0
    %1303 = vmatpush1.bf16.msra.mxu0 0
    %1304 = vmatprep.subr.bf16.mxu0 0
    %1305 = vmatpush1.bf16.msra.mxu0 0
    %1306 = vmatprep.subr.bf16.mxu0 0
    %1307 = vmatpush1.bf16.msra.mxu0 0
    %1308 = vmatprep.subr.bf16.mxu0 0
    %1309 = vmatpush1.bf16.msra.mxu0 0
    %1310 = vmatprep.mubr.bf16.mxu0 0
    %1311 = vmatmul.mubr.bf16.gmra.mrb[0].mxu0 %v1273
    %v1312 = vpop.f32.mrb[0].mxu0
    %v1313 = vadd.f32 0.0, %v1312
    %v1314 = vpop.f32.mrb[0].mxu0
    %v1315 = vpop.f32.mrb[0].mxu0
    %v1316 = vpop.f32.mrb[0].mxu0
    %1317 = vdwg.mxu0
    %v1318 = vld [vmem:[#allocation2] sm:$0xff]
    %v1319 = vld [vmem:[#allocation3] sm:$0xff]
    %v1321 = vunpack.c.l.b16 %v1319
    %v1322 = vunpack.c.h.b16 %v1319
    %v1323 = vld [vmem:[#allocation4] sm:$0xff]
    %v1325 = vunpack.c.l.b16 %v1323
    %v1326 = vunpack.c.h.b16 %v1323
    %1328 = vrot.lane.b32.xlu0 %v1318, 104
    %v1329 = vpop.permute.xlu0 %1328
    %v1331 = vsel %vm290, %v1329, 0
    %1333 = vmatprep.subr.bf16.mxu0 0
    %1334 = vmatpush1.bf16.msra.mxu0 %v296
    %1335 = vmatprep.subr.bf16.mxu0 0
    %1336 = vmatpush1.bf16.msra.mxu0 0
    %1337 = vmatprep.subr.bf16.mxu0 0
    %1338 = vmatpush1.bf16.msra.mxu0 0
    %1339 = vmatprep.subr.bf16.mxu0 0
    %1340 = vmatpush1.bf16.msra.mxu0 0
    %1341 = vmatprep.subr.bf16.mxu0 0
    %1342 = vmatpush1.bf16.msra.mxu0 0
    %1343 = vmatprep.subr.bf16.mxu0 0
    %1344 = vmatpush1.bf16.msra.mxu0 0
    %1345 = vmatprep.subr.bf16.mxu0 0
    %1346 = vmatpush1.bf16.msra.mxu0 0
    %1347 = vmatprep.subr.bf16.mxu0 0
    %1348 = vmatpush1.bf16.msra.mxu0 0
    %1349 = vmatprep.subr.bf16.mxu0 0
    %1350 = vmatpush1.bf16.msra.mxu0 0
    %1351 = vmatprep.subr.bf16.mxu0 0
    %1352 = vmatpush1.bf16.msra.mxu0 0
    %1353 = vmatprep.subr.bf16.mxu0 0
    %1354 = vmatpush1.bf16.msra.mxu0 0
    %1355 = vmatprep.subr.bf16.mxu0 0
    %1356 = vmatpush1.bf16.msra.mxu0 0
    %1357 = vmatprep.subr.bf16.mxu0 0
    %1358 = vmatpush1.bf16.msra.mxu0 0
    %1359 = vmatprep.subr.bf16.mxu0 0
    %1360 = vmatpush1.bf16.msra.mxu0 0
    %1361 = vmatprep.subr.bf16.mxu0 0
    %1362 = vmatpush1.bf16.msra.mxu0 0
    %1363 = vmatprep.subr.bf16.mxu0 0
    %1364 = vmatpush1.bf16.msra.mxu0 0
    %1365 = vmatprep.mubr.bf16.mxu0 0
    %1366 = vmatmul.mubr.bf16.gmra.mrb[0].mxu0 %v1331
    %v1367 = vpop.f32.mrb[0].mxu0
    %v1368 = vadd.f32 0.0, %v1367
    %v1369 = vpop.f32.mrb[0].mxu0
    %v1370 = vpop.f32.mrb[0].mxu0
    %v1371 = vadd.f32 0.0, %v1370
    %v1372 = vpop.f32.mrb[0].mxu0
    %1373 = vdwg.mxu0
    %1376 = vrot.lane.b32.xlu0 %v1368, 113
    %v1377 = vpop.permute.xlu0 %1376
    %1378 = vrot.lane.b32.xlu0 %v1371, 113
    %v1379 = vpop.permute.xlu0 %1378
    %1382 = vrot.lane.b32.xlu0 %v1368, 1
    %v1383 = vpop.permute.xlu0 %1382
    %1384 = vrot.lane.b32.xlu0 %v1371, 1
    %v1385 = vpop.permute.xlu0 %1384
    %v1388 = vsel %vm353, %v1377, %v1383
    %v1389 = vsel %vm353, %v1379, %v1385
    %v1390 = vsel %vm357, %v1388, %v1368
    %v1391 = vsel %vm357, %v1389, %v1371
    %1394 = vrot.lane.b32.xlu0 %v1390, 114
    %v1395 = vpop.permute.xlu0 %1394
    %1396 = vrot.lane.b32.xlu0 %v1391, 114
    %v1397 = vpop.permute.xlu0 %1396
    %1400 = vrot.lane.b32.xlu0 %v1390, 2
    %v1401 = vpop.permute.xlu0 %1400
    %1402 = vrot.lane.b32.xlu0 %v1391, 2
    %v1403 = vpop.permute.xlu0 %1402
    %v1406 = vsel %vm374, %v1395, %v1401
    %v1407 = vsel %vm374, %v1397, %v1403
    %v1408 = vsel %vm378, %v1406, %v1390
    %v1409 = vsel %vm378, %v1407, %v1391
    %1412 = vrot.lane.b32.xlu0 %v1408, 116
    %v1413 = vpop.permute.xlu0 %1412
    %1414 = vrot.lane.b32.xlu0 %v1409, 116
    %v1415 = vpop.permute.xlu0 %1414
    %1418 = vrot.lane.b32.xlu0 %v1408, 4
    %v1419 = vpop.permute.xlu0 %1418
    %1420 = vrot.lane.b32.xlu0 %v1409, 4
    %v1421 = vpop.permute.xlu0 %1420
    %v1424 = vsel %vm395, %v1413, %v1419
    %v1425 = vsel %vm395, %v1415, %v1421
    %v1426 = vsel %vm399, %v1424, %v1408
    %v1427 = vsel %vm399, %v1425, %v1409
    %v1428 = vunpack.c.l.b16 %v1318
    %v1429 = vunpack.c.h.b16 %v1318
    %v1430 = vpack.c.b16 %v1428, %v1428
    %1431 = vrot.lane.b32.xlu0 %v1430, 104
    %v1432 = vpop.permute.xlu0 %1431
    %v1433 = vpack.c.b16 %v1321, %v1321
    %1434 = vrot.lane.b32.xlu0 %v1433, 104
    %v1435 = vpop.permute.xlu0 %1434
    %v1437 = vsel %vm290, %v1432, 0
    %v1440 = vsel %vm290, %v1435, 0
    %1442 = vmatprep.subr.bf16.mxu0 0
    %1443 = vmatpush1.bf16.xpose.msra.mxu0 %v1440
    %1444 = vmatprep.subr.bf16.mxu0 0
    %1445 = vmatpush1.bf16.xpose.msra.mxu0 0
    %1446 = vmatprep.subr.bf16.mxu0 0
    %1447 = vmatpush1.bf16.xpose.msra.mxu0 0
    %1448 = vmatprep.subr.bf16.mxu0 0
    %1449 = vmatpush1.bf16.xpose.msra.mxu0 0
    %1450 = vmatprep.subr.bf16.mxu0 0
    %1451 = vmatpush1.bf16.xpose.msra.mxu0 0
    %1452 = vmatprep.subr.bf16.mxu0 0
    %1453 = vmatpush1.bf16.xpose.msra.mxu0 0
    %1454 = vmatprep.subr.bf16.mxu0 0
    %1455 = vmatpush1.bf16.xpose.msra.mxu0 0
    %1456 = vmatprep.subr.bf16.mxu0 0
    %1457 = vmatpush1.bf16.xpose.msra.mxu0 0
    %1458 = vmatprep.subr.bf16.mxu0 0
    %1459 = vmatpush1.bf16.xpose.msra.mxu0 0
    %1460 = vmatprep.subr.bf16.mxu0 0
    %1461 = vmatpush1.bf16.xpose.msra.mxu0 0
    %1462 = vmatprep.subr.bf16.mxu0 0
    %1463 = vmatpush1.bf16.xpose.msra.mxu0 0
    %1464 = vmatprep.subr.bf16.mxu0 0
    %1465 = vmatpush1.bf16.xpose.msra.mxu0 0
    %1466 = vmatprep.subr.bf16.mxu0 0
    %1467 = vmatpush1.bf16.xpose.msra.mxu0 0
    %1468 = vmatprep.subr.bf16.mxu0 0
    %1469 = vmatpush1.bf16.xpose.msra.mxu0 0
    %1470 = vmatprep.subr.bf16.mxu0 0
    %1471 = vmatpush1.bf16.xpose.msra.mxu0 0
    %1472 = vmatprep.subr.bf16.mxu0 0
    %1473 = vmatpush1.bf16.xpose.msra.mxu0 0
    %1474 = vmatprep.mubr.bf16.mxu0 0
    %1475 = vmatmul.mubr.bf16.gmra.mrb[0].mxu0 %v1437
    %v1476 = vpop.f32.mrb[0].mxu0
    %v1477 = vadd.f32 %v1426, %v1476
    %v1478 = vpop.f32.mrb[0].mxu0
    %v1479 = vpop.f32.mrb[0].mxu0
    %v1480 = vpop.f32.mrb[0].mxu0
    %1481 = vdwg.mxu0
    %v1482 = vpack.c.b16 %v1429, %v1429
    %1483 = vrot.lane.b32.xlu0 %v1482, 104
    %v1484 = vpop.permute.xlu0 %1483
    %v1485 = vpack.c.b16 %v1322, %v1322
    %1486 = vrot.lane.b32.xlu0 %v1485, 104
    %v1487 = vpop.permute.xlu0 %1486
    %v1489 = vsel %vm290, %v1484, 0
    %v1492 = vsel %vm290, %v1487, 0
    %1494 = vmatprep.subr.bf16.mxu0 0
    %1495 = vmatpush1.bf16.xpose.msra.mxu0 %v1492
    %1496 = vmatprep.subr.bf16.mxu0 0
    %1497 = vmatpush1.bf16.xpose.msra.mxu0 0
    %1498 = vmatprep.subr.bf16.mxu0 0
    %1499 = vmatpush1.bf16.xpose.msra.mxu0 0
    %1500 = vmatprep.subr.bf16.mxu0 0
    %1501 = vmatpush1.bf16.xpose.msra.mxu0 0
    %1502 = vmatprep.subr.bf16.mxu0 0
    %1503 = vmatpush1.bf16.xpose.msra.mxu0 0
    %1504 = vmatprep.subr.bf16.mxu0 0
    %1505 = vmatpush1.bf16.xpose.msra.mxu0 0
    %1506 = vmatprep.subr.bf16.mxu0 0
    %1507 = vmatpush1.bf16.xpose.msra.mxu0 0
    %1508 = vmatprep.subr.bf16.mxu0 0
    %1509 = vmatpush1.bf16.xpose.msra.mxu0 0
    %1510 = vmatprep.subr.bf16.mxu0 0
    %1511 = vmatpush1.bf16.xpose.msra.mxu0 0
    %1512 = vmatprep.subr.bf16.mxu0 0
    %1513 = vmatpush1.bf16.xpose.msra.mxu0 0
    %1514 = vmatprep.subr.bf16.mxu0 0
    %1515 = vmatpush1.bf16.xpose.msra.mxu0 0
    %1516 = vmatprep.subr.bf16.mxu0 0
    %1517 = vmatpush1.bf16.xpose.msra.mxu0 0
    %1518 = vmatprep.subr.bf16.mxu0 0
    %1519 = vmatpush1.bf16.xpose.msra.mxu0 0
    %1520 = vmatprep.subr.bf16.mxu0 0
    %1521 = vmatpush1.bf16.xpose.msra.mxu0 0
    %1522 = vmatprep.subr.bf16.mxu0 0
    %1523 = vmatpush1.bf16.xpose.msra.mxu0 0
    %1524 = vmatprep.subr.bf16.mxu0 0
    %1525 = vmatpush1.bf16.xpose.msra.mxu0 0
    %1526 = vmatprep.mubr.bf16.mxu0 0
    %1527 = vmatmul.mubr.bf16.gmra.mrb[0].mxu0 %v1489
    %v1528 = vpop.f32.mrb[0].mxu0
    %v1529 = vadd.f32 %v1427, %v1528
    %v1530 = vpop.f32.mrb[0].mxu0
    %v1531 = vpop.f32.mrb[0].mxu0
    %v1532 = vpop.f32.mrb[0].mxu0
    %1533 = vdwg.mxu0
    %v1534 = vsel %vm290, %v1477, -inf
    %1535 = vmax.xlane.f32.xlu0 %v1534
    %v1536 = vpop.xlane.xlu0 %1535
    %v1537 = vsel %vm290, %v1529, -inf
    %1538 = vmax.xlane.f32.xlu0 %v1537
    %v1539 = vpop.xlane.xlu0 %1538
    %v1540 = vsub.f32 %v1477, %v1536
    %v1541 = vsub.f32 %v1529, %v1539
    %v1542 = vpack.c.bf16 %v1540, %v1540
    %v1543 = vpack.c.bf16 %v1541, %v1541
    %v1545 = vmul.bf16 %v1542, 1069105081
    %v1546 = vpow.bf16.pop %v1545
    %v1548 = vmul.bf16 %v1543, 1069105081
    %v1549 = vpow.bf16.pop %v1548
    %v1550 = vunpack.c.l.bf16 %v1546
    %v1551 = vunpack.c.l.bf16 %v1549
    %v1552 = vsel %vm290, %v1550, 0.0
    %1553 = vadd.xlane.f32.xlu0 %v1552
    %v1554 = vpop.xlane.xlu0 %1553
    %v1555 = vsel %vm290, %v1551, 0.0
    %1556 = vadd.xlane.f32.xlu0 %v1555
    %v1557 = vpop.xlane.xlu0 %1556
    %v1558 = vrcp.pop %v1554
    %v1559 = vrcp.pop %v1557
    %v1560 = vmul.f32 %v1550, %v1558
    %v1561 = vmul.f32 %v1551, %v1559
    %v1562 = vpack.c.bf16 %v1560, %v1560
    %v1563 = vpack.c.bf16 %v1561, %v1561
    %s1564 = scalar_lea.vmem [#allocation14], 12
    %1565 = vst.msk [vmem:[%s1564] sm:$0xf] %vm529, %v1562
    %1566 = vst.msk [vmem:[%s1564 + $0x10] sm:$0xf] %vm529, %v1563
    %v1567 = vpack.c.b16 %v1325, %v1325
    %1568 = vrot.lane.b32.xlu0 %v1567, 104
    %v1569 = vpop.permute.xlu0 %1568
    %v1571 = vsel %vm290, %v1562, 0
    %v1574 = vsel %vm294, %v1569, 0
    %1576 = vmatprep.subr.bf16.mxu0 0
    %1577 = vmatpush1.bf16.msra.mxu0 %v1574
    %1578 = vmatprep.subr.bf16.mxu0 0
    %1579 = vmatpush1.bf16.msra.mxu0 0
    %1580 = vmatprep.subr.bf16.mxu0 0
    %1581 = vmatpush1.bf16.msra.mxu0 0
    %1582 = vmatprep.subr.bf16.mxu0 0
    %1583 = vmatpush1.bf16.msra.mxu0 0
    %1584 = vmatprep.subr.bf16.mxu0 0
    %1585 = vmatpush1.bf16.msra.mxu0 0
    %1586 = vmatprep.subr.bf16.mxu0 0
    %1587 = vmatpush1.bf16.msra.mxu0 0
    %1588 = vmatprep.subr.bf16.mxu0 0
    %1589 = vmatpush1.bf16.msra.mxu0 0
    %1590 = vmatprep.subr.bf16.mxu0 0
    %1591 = vmatpush1.bf16.msra.mxu0 0
    %1592 = vmatprep.subr.bf16.mxu0 0
    %1593 = vmatpush1.bf16.msra.mxu0 0
    %1594 = vmatprep.subr.bf16.mxu0 0
    %1595 = vmatpush1.bf16.msra.mxu0 0
    %1596 = vmatprep.subr.bf16.mxu0 0
    %1597 = vmatpush1.bf16.msra.mxu0 0
    %1598 = vmatprep.subr.bf16.mxu0 0
    %1599 = vmatpush1.bf16.msra.mxu0 0
    %1600 = vmatprep.subr.bf16.mxu0 0
    %1601 = vmatpush1.bf16.msra.mxu0 0
    %1602 = vmatprep.subr.bf16.mxu0 0
    %1603 = vmatpush1.bf16.msra.mxu0 0
    %1604 = vmatprep.subr.bf16.mxu0 0
    %1605 = vmatpush1.bf16.msra.mxu0 0
    %1606 = vmatprep.subr.bf16.mxu0 0
    %1607 = vmatpush1.bf16.msra.mxu0 0
    %1608 = vmatprep.mubr.bf16.mxu0 0
    %1609 = vmatmul.mubr.bf16.gmra.mrb[0].mxu0 %v1571
    %v1610 = vpop.f32.mrb[0].mxu0
    %v1611 = vadd.f32 0.0, %v1610
    %v1612 = vpop.f32.mrb[0].mxu0
    %v1613 = vpop.f32.mrb[0].mxu0
    %v1614 = vpop.f32.mrb[0].mxu0
    %1615 = vdwg.mxu0
    %v1616 = vpack.c.b16 %v1326, %v1326
    %1617 = vrot.lane.b32.xlu0 %v1616, 104
    %v1618 = vpop.permute.xlu0 %1617
    %v1620 = vsel %vm290, %v1563, 0
    %v1623 = vsel %vm294, %v1618, 0
    %1625 = vmatprep.subr.bf16.mxu0 0
    %1626 = vmatpush1.bf16.msra.mxu0 %v1623
    %1627 = vmatprep.subr.bf16.mxu0 0
    %1628 = vmatpush1.bf16.msra.mxu0 0
    %1629 = vmatprep.subr.bf16.mxu0 0
    %1630 = vmatpush1.bf16.msra.mxu0 0
    %1631 = vmatprep.subr.bf16.mxu0 0
    %1632 = vmatpush1.bf16.msra.mxu0 0
    %1633 = vmatprep.subr.bf16.mxu0 0
    %1634 = vmatpush1.bf16.msra.mxu0 0
    %1635 = vmatprep.subr.bf16.mxu0 0
    %1636 = vmatpush1.bf16.msra.mxu0 0
    %1637 = vmatprep.subr.bf16.mxu0 0
    %1638 = vmatpush1.bf16.msra.mxu0 0
    %1639 = vmatprep.subr.bf16.mxu0 0
    %1640 = vmatpush1.bf16.msra.mxu0 0
    %1641 = vmatprep.subr.bf16.mxu0 0
    %1642 = vmatpush1.bf16.msra.mxu0 0
    %1643 = vmatprep.subr.bf16.mxu0 0
    %1644 = vmatpush1.bf16.msra.mxu0 0
    %1645 = vmatprep.subr.bf16.mxu0 0
    %1646 = vmatpush1.bf16.msra.mxu0 0
    %1647 = vmatprep.subr.bf16.mxu0 0
    %1648 = vmatpush1.bf16.msra.mxu0 0
    %1649 = vmatprep.subr.bf16.mxu0 0
    %1650 = vmatpush1.bf16.msra.mxu0 0
    %1651 = vmatprep.subr.bf16.mxu0 0
    %1652 = vmatpush1.bf16.msra.mxu0 0
    %1653 = vmatprep.subr.bf16.mxu0 0
    %1654 = vmatpush1.bf16.msra.mxu0 0
    %1655 = vmatprep.subr.bf16.mxu0 0
    %1656 = vmatpush1.bf16.msra.mxu0 0
    %1657 = vmatprep.mubr.bf16.mxu0 0
    %1658 = vmatmul.mubr.bf16.gmra.mrb[0].mxu0 %v1620
    %v1659 = vpop.f32.mrb[0].mxu0
    %v1660 = vadd.f32 0.0, %v1659
    %v1661 = vpop.f32.mrb[0].mxu0
    %v1662 = vpop.f32.mrb[0].mxu0
    %v1663 = vpop.f32.mrb[0].mxu0
    %1664 = vdwg.mxu0
    %1667 = vrot.lane.b32.xlu0 %v917, 8
    %v1668 = vpop.permute.xlu0 %1667
    %1669 = vrot.lane.b32.xlu0 %v966, 8
    %v1670 = vpop.permute.xlu0 %1669
    %1675 = vrot.lane.b32.xlu0 %v1264, 16
    %v1676 = vpop.permute.xlu0 %1675
    %1677 = vrot.lane.b32.xlu0 %v1313, 16
    %v1678 = vpop.permute.xlu0 %1677
    %1683 = vrot.lane.b32.xlu0 %v1611, 24
    %v1684 = vpop.permute.xlu0 %1683
    %1685 = vrot.lane.b32.xlu0 %v1660, 24
    %v1686 = vpop.permute.xlu0 %1685
    %v1689 = vsel %vm290, %v573, %v1668
    %v1690 = vsel %vm290, %v619, %v1670
    %vm1691 = vcmask 130048
    %v1692 = vsel %vm1691, %v1689, %v1676
    %v1693 = vsel %vm1691, %v1690, %v1678
    %vm1694 = vcmask 195584
    %v1695 = vsel %vm1694, %v1692, %v1684
    %v1696 = vsel %vm1694, %v1693, %v1686
    %1697 = vst.msk [vmem:[#allocation13] sm:$0xff] %vm103, %v1695
    %1698 = vst.msk [vmem:[#allocation13 + $0x8] sm:$0xff] %vm103, %v1696
    // Predicated region
    $region38: #{tpu_custom_call.1} parent=1 // pred_check
      _
    $region39: #{tpu_custom_call.1} parent=1 // pred_check_branch
      %1700 = sbr.rel (0) target = $region41
    $region40: #{tpu_custom_call.1} parent=1 // pred_region
      %s1702 = ssub.s32 256, 256
      %1703 = vsyncadd [#allocation7], %s1702
      %s1704 = sshll.u32 [#allocation13], 4
      %s1705 = int_to_ptr.vmem [resolvable:$true] %s1704
      %1710 = dma.vmem_to_hbm [thread:$0]  %s1705, 256, %s5, [#allocation7], 128, 128, 8
    $region41: #{tpu_custom_call.1} parent=1 // pred_fallthru
      _
    // Predicated region
    $region42: #{tpu_custom_call.1} parent=1 // pred_check
      _
    $region43: #{tpu_custom_call.1} parent=1 // pred_check_branch
      %1712 = sbr.rel (0) target = $region45
    $region44: #{tpu_custom_call.1} parent=1 // pred_region
      %s1714 = ssub.s32 512, 512
      %1715 = vsyncadd [#allocation15], %s1714
      %s1716 = sshll.u32 [#allocation14], 4
      %s1717 = int_to_ptr.vmem [resolvable:$true] %s1716
      %1722 = dma.vmem_to_hbm [thread:$0]  %s1717, 512, %s6, [#allocation15], 64, 64, 4
    $region45: #{tpu_custom_call.1} parent=1 // pred_fallthru
      _
    // Predicated region
    $region46: #{tpu_custom_call.1} parent=1 // pred_check
      _
    $region47: #{tpu_custom_call.1} parent=1 // pred_check_branch
      %1724 = sbr.rel (0) target = $region49
    $region48: #{tpu_custom_call.1} parent=1 // pred_region
      %1725 = dma.done [#allocation7], 256
    $region49: #{tpu_custom_call.1} parent=1 // pred_fallthru
      _
    // Predicated region
    $region50: #{tpu_custom_call.1} parent=1 // pred_check
      _
    $region51: #{tpu_custom_call.1} parent=1 // pred_check_branch
      %1727 = sbr.rel (0) target = $region53
    $region52: #{tpu_custom_call.1} parent=1 // pred_region
      %1728 = dma.done [#allocation15], 512
    $region53: #{tpu_custom_call.1} parent=1 // pred_fallthru
      _
    %1729 = vsyncpa [#allocation6], 1
    %1730 = vsyncpa [#allocation9], 1
    %1731 = vsyncpa [#allocation12], 1
    %1732 = vsyncpa [#allocation7], 1
    %1733 = vsyncpa [#allocation15], 1

</llo_original>
